<compile_context>
chip_gen: v6e
topology: v6e:2x2x1
jax: 0.10.0
libtpu: 0.0.40
codegen_flags: <defaults>
</compile_context>

<pallas_src>
import functools

import jax
import jax.numpy as jnp
from jax import lax
from jax.experimental import pallas as pl
from jax.experimental.pallas import tpu as pltpu


def _repulsion_kernel(q_ref, kT_ref, kk_ref, out_ref, *, knn, h, row_tile):
    """One (batch, row-tile) grid step: k-NN repulsion partial sum."""
    t = pl.program_id(1)
    row_base = t * row_tile

    q = q_ref[...].astype(jnp.float32)            # (TQ, D)
    kT = kT_ref[...].astype(jnp.float32)          # (D, N)  lane-dense keys
    kk = kk_ref[...].astype(jnp.float32)          # (1, N)  precomputed |k|^2
    tq = q.shape[0]
    n = kT.shape[1]

    # Pairwise squared distances via the Gram trick on the MXU.  Keys come in
    # already transposed, so contraction is q[:,d] * kT[d,:] with no .T and
    # no kk relayout.  HIGHEST precision keeps the f32 cancellation error
    # negligible vs. nearest-neighbour distances (inputs are centered in the
    # wrapper).
    gram = lax.dot_general(
        q, kT, (((1,), (0,)), ((), ())),          # (TQ, N)
        precision=lax.Precision.HIGHEST,
        preferred_element_type=jnp.float32)
    qq = jnp.sum(q * q, axis=-1, keepdims=True)   # (TQ, 1)
    dist = jnp.maximum(qq + kk - 2.0 * gram, 0.0)

    # Column / row ids.  col_b is materialized ONCE and reused everywhere
    # (the unrolled knn loop would otherwise re-emit the broadcast each
    # iteration -- JAX does not CSE broadcast_in_dim).
    col_ids = lax.broadcasted_iota(jnp.int32, (1, n), 1)               # (1, N)
    col_b = jnp.broadcast_to(col_ids, (tq, n))                         # (TQ, N)
    row_ids = row_base + lax.broadcasted_iota(jnp.int32, (tq, 1), 0)   # (TQ, 1)

    inf = jnp.float32(jnp.inf)
    # Mask the self-distance (global diagonal) by index; replaces the old
    # `offset` min-extraction pass.
    dcur = jnp.where(col_b == row_ids, inf, dist)

    # Iterative min extraction: pull the knn smallest distances per row,
    # removing exactly one occurrence of the minimum each time (keeps
    # argsort/torch semantics even for exactly tied distances).  The last
    # iteration skips the dead mask update.
    mins = []
    for i in range(knn):
        m = jnp.min(dcur, axis=-1, keepdims=True)                      # (TQ, 1)
        mins.append(m)
        if i + 1 < knn:
            first = jnp.min(jnp.where(dcur == m, col_b, n),
                            axis=-1, keepdims=True)                    # (TQ, 1)
            dcur = jnp.where(col_b == first, inf, dcur)

    # Deferred weighting: exp/mul/sum on the tiny (TQ, 1) minima, off the
    # serial min-extraction dependency chain.
    neg_inv_h2 = jnp.float32(-1.0 / (h * h))
    row_acc = jnp.zeros((tq, 1), jnp.float32)
    for m in mins:
        row_acc = row_acc - m * jnp.exp(m * neg_inv_h2)

    tot = jnp.sum(row_acc).reshape(1, 1)
    out_ref[...] = jnp.broadcast_to(tot, (8, 128))


def _pick_row_tile(n, max_elems):
    """Largest row tile TQ (multiple of 8, dividing N) with TQ*N <= budget."""
    cap = max(8, max_elems // max(n, 1))
    if n <= cap:
        return n
    t = min((cap // 8) * 8, n)
    while t >= 8:
        if n % t == 0:
            return t
        t -= 8
    return n  # N not tileable in multiples of 8: fall back to full rows.


def repulsion_loss(pc, knn=4, h=0.03, row_tile=None):
    """pc: (B, N, 3) float array. Returns scalar float32 loss."""
    B, N, D = pc.shape
    assert knn <= N - 1, "knn must be <= N-1 (otherwise inf*0 -> NaN)"

    # Per-generation VMEM budget: derive from the actual chip (v7x: 64 MiB
    # physical -> ~46 MiB target; v5e/v6e: 128 MiB -> ~92 MiB target).
    try:
        vmem_cap = int(pltpu.get_tpu_info().vmem_capacity_bytes)
    except Exception:  # no device / unknown chip: assume the smallest (v7x)
        vmem_cap = 64 * 2**20
    vmem_target = int(vmem_cap * 0.72)

    # ~14 live f32 (TQ, N) temporaries in the worst case.
    max_elems = max(1 << 19, vmem_target // (14 * 4))
    tq = row_tile if row_tile is not None else _pick_row_tile(N, max_elems)
    assert N % tq == 0, "row tile must divide N"
    T = N // tq

    # Center each batch element (distances are translation-invariant) so the
    # Gram-trick cancellation stays benign even for offset point clouds, and
    # precompute lane-dense transposed keys + key squared norms once (XLA).
    pc32 = pc.astype(jnp.float32)
    pc_c = pc32 - jnp.mean(pc32, axis=1, keepdims=True)        # (B, N, D)
    kT = jnp.transpose(pc_c, (0, 2, 1))                        # (B, D, N)
    kk = jnp.sum(pc_c * pc_c, axis=-1)[:, None, :]             # (B, 1, N)

    kernel = functools.partial(_repulsion_kernel, knn=knn, h=h, row_tile=tq)

    per_step_bytes = (14 * tq * N * 4          # (TQ, N) f32 temporaries
                      + 2 * tq * 128 * 4       # double-buffered query tile
                      + 4 * 8 * N * 4          # kT + kk blocks, double-buffered
                      + 2 * 8 * 128 * 4)       # output block
    vmem_limit = int(min(vmem_target, max(32 * 2**20, per_step_bytes)))

    cost = pl.CostEstimate(
        flops=int(B * N * N * (2 * D + 3 + 6 * knn)),
        transcendentals=int(B * N * knn),
        bytes_accessed=int(B * N * D * 4            # query tiles (once total)
                           + B * T * (D + 1) * N * 4  # kT + kk per step
                           + B * T * 8 * 128 * 4),
    )

    out = pl.pallas_call(
        kernel,
        out_shape=jax.ShapeDtypeStruct((B, T, 8, 128), jnp.float32),
        grid_spec=pltpu.PrefetchScalarGridSpec(
            num_scalar_prefetch=0,
            grid=(B, T),
            in_specs=[
                # query row tile: kernel sees (TQ, D)
                pl.BlockSpec((pl.Squeezed(), tq, D), lambda b, t: (b, t, 0)),
                # all key points of this batch element, lane-dense: (D, N)
                pl.BlockSpec((pl.Squeezed(), D, N), lambda b, t: (b, 0, 0)),
                # precomputed key squared norms, lane-dense: (1, N)
                pl.BlockSpec((pl.Squeezed(), 1, N), lambda b, t: (b, 0, 0)),
            ],
            out_specs=pl.BlockSpec(
                (pl.Squeezed(), pl.Squeezed(), 8, 128),
                lambda b, t: (b, t, 0, 0)),
        ),
        compiler_params=pltpu.CompilerParams(
            dimension_semantics=("parallel", "parallel"),
            vmem_limit_bytes=vmem_limit),
        cost_estimate=cost,
    )(pc_c, kT, kk)
    return jnp.sum(out[:, :, 0, 0])


def repulsion_loss_ref(pc, knn=4, h=0.03, offset=1):
    """Pure-JAX reference mirroring torch get_knn_idx_dist + loss."""
    diff = pc[:, :, None, :] - pc[:, None, :, :]
    dist = jnp.sum(diff * diff, axis=-1)                     # (B, N, N)
    knn_dist = jnp.sort(dist, axis=-1)[:, :, offset:knn + offset]
    weight = jnp.exp(-knn_dist / (h ** 2))
    return jnp.sum(-knn_dist * weight)


if __name__ == "__main__":
    key = jax.random.PRNGKey(0)
    k1, k2 = jax.random.split(key)

    # Case 1: small point cloud, one row tile per batch element.
    B, N, D = 2, 64, 3
    pc = 0.05 * jax.random.normal(k1, (B, N, D), dtype=jnp.float32)
    loss = jax.block_until_ready(repulsion_loss(pc, knn=4, h=0.03))
    ref = repulsion_loss_ref(pc, knn=4, h=0.03)
    assert jnp.allclose(loss, ref, rtol=1e-3, atol=1e-5), (loss, ref)

    # Case 2: exercise the row-tiled path (grid = (B, N // 32)).
    B2, N2 = 2, 128
    pc2 = 0.05 * jax.random.normal(k2, (B2, N2, D), dtype=jnp.float32)
    loss2 = jax.block_until_ready(repulsion_loss(pc2, knn=4, h=0.03, row_tile=32))
    ref2 = repulsion_loss_ref(pc2, knn=4, h=0.03)
    assert jnp.allclose(loss2, ref2, rtol=1e-3, atol=1e-5), (loss2, ref2)

    print("KERNEL_OK")
</pallas_src>

<mosaic_0001>
module attributes {stable_mosaic.version = 11 : i64} {
  func.func @_repulsion_kernel(%arg0: i32, %arg1: i32, %arg2: memref<1x64x3xf32, #tpu.memory_space<vmem>>, %arg3: memref<1x3x64xf32, #tpu.memory_space<vmem>>, %arg4: memref<1x1x64xf32, #tpu.memory_space<vmem>>, %arg5: memref<1x1x8x128xf32, #tpu.memory_space<vmem>>) attributes {dimension_semantics = [#tpu.dimension_semantics<parallel>, #tpu.dimension_semantics<parallel>], iteration_bounds = array<i64: 2, 1>, scalar_prefetch = 0 : i64, scratch_operands = 0 : i64, tpu.core_type = #tpu.core_type<tc>, window_params = [{transform_indices = @transform_0, window_bounds = array<i64: 1, 64, 3>}, {transform_indices = @transform_1, window_bounds = array<i64: 1, 3, 64>}, {transform_indices = @transform_2, window_bounds = array<i64: 1, 1, 64>}, {transform_indices = @transform_3, window_bounds = array<i64: 1, 1, 8, 128>}]} {
    %c64_i32 = arith.constant 64 : i32
    %0 = arith.muli %arg1, %c64_i32 : i32
    %c0 = arith.constant 0 : index
    %c0_0 = arith.constant 0 : index
    %c0_1 = arith.constant 0 : index
    %1 = vector.load %arg2[%c0, %c0_0, %c0_1] : memref<1x64x3xf32, #tpu.memory_space<vmem>>, vector<1x64x3xf32>
    %2 = vector.shape_cast %1 : vector<1x64x3xf32> to vector<64x3xf32>
    %c0_2 = arith.constant 0 : index
    %c0_3 = arith.constant 0 : index
    %c0_4 = arith.constant 0 : index
    %3 = vector.load %arg3[%c0_2, %c0_3, %c0_4] : memref<1x3x64xf32, #tpu.memory_space<vmem>>, vector<1x3x64xf32>
    %4 = vector.shape_cast %3 : vector<1x3x64xf32> to vector<3x64xf32>
    %c0_5 = arith.constant 0 : index
    %c0_6 = arith.constant 0 : index
    %c0_7 = arith.constant 0 : index
    %5 = vector.load %arg4[%c0_5, %c0_6, %c0_7] : memref<1x1x64xf32, #tpu.memory_space<vmem>>, vector<1x1x64xf32>
    %6 = vector.shape_cast %5 : vector<1x1x64xf32> to vector<1x64xf32>
    %cst = arith.constant dense<0.000000e+00> : vector<64x64xf32>
    %7 = tpu.matmul %2, %4, %cst {dimension_numbers = #tpu.dot_dimension_numbers<[1], [0], [0], [1], [0, 0, 1, 1], [], []>, precision = #tpu.contract_precision<fp32>} : vector<64x3xf32>, vector<3x64xf32>, vector<64x64xf32> -> vector<64x64xf32>
    %8 = arith.mulf %2, %2 : vector<64x3xf32>
    %cst_8 = arith.constant dense<0.000000e+00> : vector<64xf32>
    %9 = vector.multi_reduction <add>, %8, %cst_8 [1] : vector<64x3xf32> to vector<64xf32>
    %10 = vector.shape_cast %9 : vector<64xf32> to vector<64x1xf32>
    %11 = vector.broadcast %10 : vector<64x1xf32> to vector<64x64xf32>
    %12 = vector.broadcast %6 : vector<1x64xf32> to vector<64x64xf32>
    %13 = arith.addf %11, %12 : vector<64x64xf32>
    %cst_9 = arith.constant 2.000000e+00 : f32
    %14 = vector.broadcast %cst_9 : f32 to vector<64x64xf32>
    %15 = arith.mulf %14, %7 : vector<64x64xf32>
    %16 = arith.subf %13, %15 : vector<64x64xf32>
    %cst_10 = arith.constant 0.000000e+00 : f32
    %17 = vector.broadcast %cst_10 : f32 to vector<64x64xf32>
    %18 = arith.maximumf %16, %17 : vector<64x64xf32>
    %19 = tpu.iota {dimensions = array<i32: 1>} : vector<1x64xi32>
    %20 = vector.shape_cast %19 : vector<1x64xi32> to vector<1x64xi32>
    %21 = vector.broadcast %20 : vector<1x64xi32> to vector<64x64xi32>
    %22 = tpu.iota {dimensions = array<i32: 0>} : vector<64x1xi32>
    %23 = vector.broadcast %0 : i32 to vector<64x1xi32>
    %24 = arith.addi %23, %22 : vector<64x1xi32>
    %25 = vector.broadcast %24 : vector<64x1xi32> to vector<64x64xi32>
    %26 = arith.cmpi eq, %21, %25 : vector<64x64xi32>
    %cst_11 = arith.constant 0x7F800000 : f32
    %27 = vector.broadcast %cst_11 : f32 to vector<64x64xf32>
    %28 = arith.select %26, %27, %18 : vector<64x64xi1>, vector<64x64xf32>
    %cst_12 = arith.constant dense<0x7F800000> : vector<64xf32>
    %29 = vector.multi_reduction <minimumf>, %28, %cst_12 [1] : vector<64x64xf32> to vector<64xf32>
    %30 = vector.shape_cast %29 : vector<64xf32> to vector<64x1xf32>
    %31 = vector.broadcast %30 : vector<64x1xf32> to vector<64x64xf32>
    %32 = arith.cmpf oeq, %28, %31 : vector<64x64xf32>
    %c64_i32_13 = arith.constant 64 : i32
    %33 = vector.broadcast %c64_i32_13 : i32 to vector<64x64xi32>
    %34 = arith.select %32, %21, %33 : vector<64x64xi1>, vector<64x64xi32>
    %cst_14 = arith.constant dense<2147483647> : vector<64xi32>
    %35 = vector.multi_reduction <minsi>, %34, %cst_14 [1] : vector<64x64xi32> to vector<64xi32>
    %36 = vector.shape_cast %35 : vector<64xi32> to vector<64x1xi32>
    %37 = vector.broadcast %36 : vector<64x1xi32> to vector<64x64xi32>
    %38 = arith.cmpi eq, %21, %37 : vector<64x64xi32>
    %cst_15 = arith.constant 0x7F800000 : f32
    %39 = vector.broadcast %cst_15 : f32 to vector<64x64xf32>
    %40 = arith.select %38, %39, %28 : vector<64x64xi1>, vector<64x64xf32>
    %cst_16 = arith.constant dense<0x7F800000> : vector<64xf32>
    %41 = vector.multi_reduction <minimumf>, %40, %cst_16 [1] : vector<64x64xf32> to vector<64xf32>
    %42 = vector.shape_cast %41 : vector<64xf32> to vector<64x1xf32>
    %43 = vector.broadcast %42 : vector<64x1xf32> to vector<64x64xf32>
    %44 = arith.cmpf oeq, %40, %43 : vector<64x64xf32>
    %c64_i32_17 = arith.constant 64 : i32
    %45 = vector.broadcast %c64_i32_17 : i32 to vector<64x64xi32>
    %46 = arith.select %44, %21, %45 : vector<64x64xi1>, vector<64x64xi32>
    %cst_18 = arith.constant dense<2147483647> : vector<64xi32>
    %47 = vector.multi_reduction <minsi>, %46, %cst_18 [1] : vector<64x64xi32> to vector<64xi32>
    %48 = vector.shape_cast %47 : vector<64xi32> to vector<64x1xi32>
    %49 = vector.broadcast %48 : vector<64x1xi32> to vector<64x64xi32>
    %50 = arith.cmpi eq, %21, %49 : vector<64x64xi32>
    %cst_19 = arith.constant 0x7F800000 : f32
    %51 = vector.broadcast %cst_19 : f32 to vector<64x64xf32>
    %52 = arith.select %50, %51, %40 : vector<64x64xi1>, vector<64x64xf32>
    %cst_20 = arith.constant dense<0x7F800000> : vector<64xf32>
    %53 = vector.multi_reduction <minimumf>, %52, %cst_20 [1] : vector<64x64xf32> to vector<64xf32>
    %54 = vector.shape_cast %53 : vector<64xf32> to vector<64x1xf32>
    %55 = vector.broadcast %54 : vector<64x1xf32> to vector<64x64xf32>
    %56 = arith.cmpf oeq, %52, %55 : vector<64x64xf32>
    %c64_i32_21 = arith.constant 64 : i32
    %57 = vector.broadcast %c64_i32_21 : i32 to vector<64x64xi32>
    %58 = arith.select %56, %21, %57 : vector<64x64xi1>, vector<64x64xi32>
    %cst_22 = arith.constant dense<2147483647> : vector<64xi32>
    %59 = vector.multi_reduction <minsi>, %58, %cst_22 [1] : vector<64x64xi32> to vector<64xi32>
    %60 = vector.shape_cast %59 : vector<64xi32> to vector<64x1xi32>
    %61 = vector.broadcast %60 : vector<64x1xi32> to vector<64x64xi32>
    %62 = arith.cmpi eq, %21, %61 : vector<64x64xi32>
    %cst_23 = arith.constant 0x7F800000 : f32
    %63 = vector.broadcast %cst_23 : f32 to vector<64x64xf32>
    %64 = arith.select %62, %63, %52 : vector<64x64xi1>, vector<64x64xf32>
    %cst_24 = arith.constant dense<0x7F800000> : vector<64xf32>
    %65 = vector.multi_reduction <minimumf>, %64, %cst_24 [1] : vector<64x64xf32> to vector<64xf32>
    %66 = vector.shape_cast %65 : vector<64xf32> to vector<64x1xf32>
    %cst_25 = arith.constant 0.000000e+00 : f32
    %67 = vector.broadcast %cst_25 : f32 to vector<64x1xf32>
    %cst_26 = arith.constant -1111.11108 : f32
    %68 = vector.broadcast %cst_26 : f32 to vector<64x1xf32>
    %69 = arith.mulf %30, %68 : vector<64x1xf32>
    %70 = math.exp %69 : vector<64x1xf32>
    %71 = arith.mulf %30, %70 : vector<64x1xf32>
    %72 = arith.subf %67, %71 : vector<64x1xf32>
    %cst_27 = arith.constant -1111.11108 : f32
    %73 = vector.broadcast %cst_27 : f32 to vector<64x1xf32>
    %74 = arith.mulf %42, %73 : vector<64x1xf32>
    %75 = math.exp %74 : vector<64x1xf32>
    %76 = arith.mulf %42, %75 : vector<64x1xf32>
    %77 = arith.subf %72, %76 : vector<64x1xf32>
    %cst_28 = arith.constant -1111.11108 : f32
    %78 = vector.broadcast %cst_28 : f32 to vector<64x1xf32>
    %79 = arith.mulf %54, %78 : vector<64x1xf32>
    %80 = math.exp %79 : vector<64x1xf32>
    %81 = arith.mulf %54, %80 : vector<64x1xf32>
    %82 = arith.subf %77, %81 : vector<64x1xf32>
    %cst_29 = arith.constant -1111.11108 : f32
    %83 = vector.broadcast %cst_29 : f32 to vector<64x1xf32>
    %84 = arith.mulf %66, %83 : vector<64x1xf32>
    %85 = math.exp %84 : vector<64x1xf32>
    %86 = arith.mulf %66, %85 : vector<64x1xf32>
    %87 = arith.subf %82, %86 : vector<64x1xf32>
    %88 = vector.shape_cast %87 : vector<64x1xf32> to vector<1x64x1xf32>
    %cst_30 = arith.constant dense<0.000000e+00> : vector<1xf32>
    %89 = vector.multi_reduction <add>, %88, %cst_30 [1, 2] : vector<1x64x1xf32> to vector<1xf32>
    %90 = vector.shape_cast %89 : vector<1xf32> to vector<1x1x1xf32>
    %91 = vector.extract %90[0, 0, 0] : f32 from vector<1x1x1xf32>
    %92 = vector.broadcast %91 : f32 to vector<1x1xf32>
    %93 = vector.shape_cast %92 : vector<1x1xf32> to vector<1x1xf32>
    %94 = vector.broadcast %93 : vector<1x1xf32> to vector<8x128xf32>
    %c0_31 = arith.constant 0 : index
    %c0_32 = arith.constant 0 : index
    %c0_33 = arith.constant 0 : index
    %c0_34 = arith.constant 0 : index
    %95 = vector.load %arg5[%c0_31, %c0_32, %c0_33, %c0_34] : memref<1x1x8x128xf32, #tpu.memory_space<vmem>>, vector<1x1x8x128xf32>
    %96 = vector.shape_cast %95 : vector<1x1x8x128xf32> to vector<8x128xf32>
    %97 = vector.shape_cast %94 : vector<8x128xf32> to vector<1x1x8x128xf32>
    tpu.vector_store %arg5[%c0_31, %c0_32, %c0_33, %c0_34], %97 {strides = array<i32>} : memref<1x1x8x128xf32, #tpu.memory_space<vmem>>, vector<1x1x8x128xf32>,
    return
  }
  func.func @transform_0(%arg0: i32, %arg1: i32) -> (i32, i32, i32) {
    %c0_i32 = arith.constant 0 : i32
    %c0_i32_0 = arith.constant 0 : i32
    return %arg0, %arg1, %c0_i32 : i32, i32, i32
  }
  func.func @transform_1(%arg0: i32, %arg1: i32) -> (i32, i32, i32) {
    %c0_i32 = arith.constant 0 : i32
    %c0_i32_0 = arith.constant 0 : i32
    %c0_i32_1 = arith.constant 0 : i32
    return %arg0, %c0_i32, %c0_i32_0 : i32, i32, i32
  }
  func.func @transform_2(%arg0: i32, %arg1: i32) -> (i32, i32, i32) {
    %c0_i32 = arith.constant 0 : i32
    %c0_i32_0 = arith.constant 0 : i32
    %c0_i32_1 = arith.constant 0 : i32
    return %arg0, %c0_i32, %c0_i32_0 : i32, i32, i32
  }
  func.func @transform_3(%arg0: i32, %arg1: i32) -> (i32, i32, i32, i32) {
    %c0_i32 = arith.constant 0 : i32
    %c0_i32_0 = arith.constant 0 : i32
    %c0_i32_1 = arith.constant 0 : i32
    return %arg0, %arg1, %c0_i32, %c0_i32_0 : i32, i32, i32, i32
  }
}

</mosaic_0001>

<llo_original>
// kernel: tpu_custom_call.1
$region0: #{tpu_custom_call.1}
  #allocation0 [shape = 'u32[]', space=smem, size = 0x4, offset = 0x4, fixed_abs, tag = 'smem constant byte address 0x4 - core index']
  #allocation1 [shape = 'u32[144,128]{1,0:T(1,128)}', space=vmem, size = 0x12000, scoped, tag = 'internal scratch']
  %s0 = inlined_call_operand.vmem [shape: f32[2,64,3], index: 0, kind: input, shape index: {}]
  %s1 = inlined_call_operand.vmem [shape: f32[2,3,64], index: 1, kind: input, shape index: {}]
  %s2 = inlined_call_operand.vmem [shape: f32[2,1,64], index: 2, kind: input, shape index: {}]
  %s3 = inlined_call_operand.hbm [shape: f32[2,1,8,128], index: 3, kind: output, shape index: {}]
  %s4 = sld [smem:[#allocation0]]
  $region45: #{tpu_custom_call.1} parent=0
    _
  %s6 = ssub.s32 1, %s4
  %s7 = scalar_select 0, %s6, %s4
  $region1: #{tpu_custom_call.1} parent=0
    #allocation2 [shape = 'u8[8192]{0}', space=vmem, size = 0x2000, scoped, tag = 'output window, operand 0']
    #allocation3 [shape = 's32[2]{0}', space=sflag, size = 0x8, scoped, tag = 'scoped memory for tpu_custom_call.1']
    %8 = vsyncpa [#allocation3], 0
    %s9 = scalar_lea.sflag [#allocation3], 1
    %10 = vsyncpa %s9, 0
    loop: start=0, step=1, limit=4
    $region2: #{tpu_custom_call.1} parent=1 // loop_pre_header
      _
    $region3: #{tpu_custom_call.1} parent=1 // loop_header
      %s12 = sphi 0, %s16
      %p13 = scmp.ge.s32.totalorder %s12, 4
      %s19 = sphi 0, %s31
      %s20 = sphi 0, %s27
      %s21 = sphi 0, %s19
      %s22 = sphi 0, %s20
      %s23 = sphi 0, %s21
      %s24 = sphi 0, %s22
      %s36 = sphi 0, %s38
      %s39 = sphi 0, %s36
      %s40 = sphi 0, %s39
      %s56 = sphi 0, %s40
      %s62 = sphi 0, %s64
      %s65 = sphi 0, %s62
      %s66 = sphi 0, %s65
      %s82 = sphi 0, %s66
      %s88 = sphi 0, %s90
      %s91 = sphi 0, %s88
      %s92 = sphi 0, %s91
      %s108 = sphi 0, %s92
      %s116 = sphi 0, %s118
      %s119 = sphi 0, %s116
      %s120 = sphi 0, %s119
      %s136 = sphi 0, %s120
    $region4: #{tpu_custom_call.1} parent=1 // loop_header_branch
      %15 = sbr.rel (%p13) target = $region8
    $region5: #{tpu_custom_call.1} parent=1 // loop_body
      %s17 = ssub.s32 %s12, 1
      %s18 = ssub.s32 %s12, 2
      %s25 = sadd.s32 1, %s20
      %p26 = scmp.ge.s32.totalorder %s25, 1
      %s27 = scalar_select %p26, 0, %s25
      %s28 = sadd.s32 1, %s19
      %s29 = scalar_select %p26, %s28, %s19
      %p30 = scmp.ge.s32.totalorder %s29, 2
      %s31 = scalar_select %p30, 0, %s29
      %s32 = ssub.s32 %s19, %s31
      %s33 = ssub.s32 %s20, %s27
      %s34 = sor.u32 %s32, %s33
      %p35 = scmp.eq.s32.totalorder %s34, 0
      %s37 = sadd.s32 %s36, 1
      %s38 = scalar_select %p35, %s36, %s37
      %p41 = pneg %p35
      %p42 = scmp.eq.s32.totalorder %s12, 1
      %p43 = por %p41, %p42
      %p44 = scmp.ne.s32.totalorder %s36, %s39
      %p45 = scmp.eq.s32.totalorder %s12, 0
      %p46 = por %p44, %p45
      %p47 = scmp.ne.s32.totalorder %s36, %s39
      %p48 = scmp.eq.s32.totalorder %s17, 1
      %p49 = por %p47, %p48
      %p50 = scmp.ne.s32.totalorder %s39, %s40
      %p51 = scmp.eq.s32.totalorder %s17, 0
      %p52 = por %p50, %p51
      %p53 = scmp.ne.s32.totalorder %s39, %s40
      %p54 = scmp.eq.s32.totalorder %s18, 1
      %p55 = por %p53, %p54
      %p57 = scmp.ne.s32.totalorder %s40, %s56
      %p58 = scmp.eq.s32.totalorder %s18, 0
      %p59 = por %p57, %p58
      %s60 = ssub.s32 %s19, %s31
      %p61 = scmp.eq.s32.totalorder %s60, 0
      %s63 = sadd.s32 %s62, 1
      %s64 = scalar_select %p61, %s62, %s63
      %p67 = pneg %p61
      %p68 = scmp.eq.s32.totalorder %s12, 1
      %p69 = por %p67, %p68
      %p70 = scmp.ne.s32.totalorder %s62, %s65
      %p71 = scmp.eq.s32.totalorder %s12, 0
      %p72 = por %p70, %p71
      %p73 = scmp.ne.s32.totalorder %s62, %s65
      %p74 = scmp.eq.s32.totalorder %s17, 1
      %p75 = por %p73, %p74
      %p76 = scmp.ne.s32.totalorder %s65, %s66
      %p77 = scmp.eq.s32.totalorder %s17, 0
      %p78 = por %p76, %p77
      %p79 = scmp.ne.s32.totalorder %s65, %s66
      %p80 = scmp.eq.s32.totalorder %s18, 1
      %p81 = por %p79, %p80
      %p83 = scmp.ne.s32.totalorder %s66, %s82
      %p84 = scmp.eq.s32.totalorder %s18, 0
      %p85 = por %p83, %p84
      %s86 = ssub.s32 %s19, %s31
      %p87 = scmp.eq.s32.totalorder %s86, 0
      %s89 = sadd.s32 %s88, 1
      %s90 = scalar_select %p87, %s88, %s89
      %p93 = pneg %p87
      %p94 = scmp.eq.s32.totalorder %s12, 1
      %p95 = por %p93, %p94
      %p96 = scmp.ne.s32.totalorder %s88, %s91
      %p97 = scmp.eq.s32.totalorder %s12, 0
      %p98 = por %p96, %p97
      %p99 = scmp.ne.s32.totalorder %s88, %s91
      %p100 = scmp.eq.s32.totalorder %s17, 1
      %p101 = por %p99, %p100
      %p102 = scmp.ne.s32.totalorder %s91, %s92
      %p103 = scmp.eq.s32.totalorder %s17, 0
      %p104 = por %p102, %p103
      %p105 = scmp.ne.s32.totalorder %s91, %s92
      %p106 = scmp.eq.s32.totalorder %s18, 1
      %p107 = por %p105, %p106
      %p109 = scmp.ne.s32.totalorder %s92, %s108
      %p110 = scmp.eq.s32.totalorder %s18, 0
      %p111 = por %p109, %p110
      %s112 = ssub.s32 %s19, %s31
      %s113 = ssub.s32 %s20, %s27
      %s114 = sor.u32 %s112, %s113
      %p115 = scmp.eq.s32.totalorder %s114, 0
      %s117 = sadd.s32 %s116, 1
      %s118 = scalar_select %p115, %s116, %s117
      %p121 = pneg %p115
      %p122 = scmp.eq.s32.totalorder %s12, 1
      %p123 = por %p121, %p122
      %p124 = scmp.ne.s32.totalorder %s116, %s119
      %p125 = scmp.eq.s32.totalorder %s12, 0
      %p126 = por %p124, %p125
      %p127 = scmp.ne.s32.totalorder %s116, %s119
      %p128 = scmp.eq.s32.totalorder %s17, 1
      %p129 = por %p127, %p128
      %p130 = scmp.ne.s32.totalorder %s119, %s120
      %p131 = scmp.eq.s32.totalorder %s17, 0
      %p132 = por %p130, %p131
      %p133 = scmp.ne.s32.totalorder %s119, %s120
      %p134 = scmp.eq.s32.totalorder %s18, 1
      %p135 = por %p133, %p134
      %p137 = scmp.ne.s32.totalorder %s120, %s136
      %p138 = scmp.eq.s32.totalorder %s18, 0
      %p139 = por %p137, %p138
      %p140 = scmp.le.s32.totalorder 1, %s12
      %p141 = scmp.lt.s32.totalorder %s12, 3
      %p142 = pnand %p140, %p141
      %p143 = pneg %p142
      // Predicated region
      $region9: #{tpu_custom_call.1} parent=5 // pred_check
        _
      $region10: #{tpu_custom_call.1} parent=5 // pred_check_branch
        %145 = sbr.rel (%p142) target = $region12
      $region11: #{tpu_custom_call.1} parent=5 // pred_region
        %s146 = ssub.s32 %s12, 1
      $region12: #{tpu_custom_call.1} parent=5 // pred_fallthru
        _
      %p147 = scmp.lt.s32.totalorder %s12, 2
      // Predicated region
      $region13: #{tpu_custom_call.1} parent=5 // pred_check
        %p148 = pneg %p147
      $region14: #{tpu_custom_call.1} parent=5 // pred_check_branch
        %150 = sbr.rel (%p148) target = $region16
      $region15: #{tpu_custom_call.1} parent=5 // pred_region
        // Predicated region
        $region17: #{tpu_custom_call.1} parent=15 // pred_check
          %p151 = pneg %p46
        $region18: #{tpu_custom_call.1} parent=15 // pred_check_branch
          %153 = sbr.rel (%p151) target = $region20
        $region19: #{tpu_custom_call.1} parent=15 // pred_region
          %s154 = smul.u32 8, %s20
          %p155 = scmp.lt.s32.totalorder %s19, 1
          %s156 = scalar_select %p155, %s19, 1
          %p157 = scmp.lt.s32.totalorder %s154, 7
          %s158 = scalar_select %p157, %s154, 7
          %s159 = smul.addr %s156, 8
          %s160 = sadd.s32 %s158, %s159
          %s161 = smul.addr %s160, 8
          %s162 = scalar_lea.vmem %s0, %s161
          %s163 = smul.u32 8, %s20
        $region20: #{tpu_custom_call.1} parent=15 // pred_fallthru
          _
        // Predicated region
        $region21: #{tpu_custom_call.1} parent=15 // pred_check
          %p164 = pneg %p72
        $region22: #{tpu_custom_call.1} parent=15 // pred_check_branch
          %166 = sbr.rel (%p164) target = $region24
        $region23: #{tpu_custom_call.1} parent=15 // pred_region
          %p167 = scmp.lt.s32.totalorder %s19, 1
          %s168 = scalar_select %p167, %s19, 1
          %s169 = smul.addr %s168, 4
          %s170 = scalar_lea.vmem %s1, %s169
        $region24: #{tpu_custom_call.1} parent=15 // pred_fallthru
          _
        // Predicated region
        $region25: #{tpu_custom_call.1} parent=15 // pred_check
          %p171 = pneg %p98
        $region26: #{tpu_custom_call.1} parent=15 // pred_check_branch
          %173 = sbr.rel (%p171) target = $region28
        $region27: #{tpu_custom_call.1} parent=15 // pred_region
          %p174 = scmp.lt.s32.totalorder %s19, 1
          %s175 = scalar_select %p174, %s19, 1
          %s176 = scalar_lea.vmem %s2, %s175
        $region28: #{tpu_custom_call.1} parent=15 // pred_fallthru
          _
      $region16: #{tpu_custom_call.1} parent=5 // pred_fallthru
        _
      %p177 = scmp.le.s32.totalorder 1, %s12
      %p178 = scmp.lt.s32.totalorder %s12, 3
      %p179 = pnand %p177, %p178
      %p180 = pneg %p179
      // Predicated region
      $region29: #{tpu_custom_call.1} parent=5 // pred_check
        _
      $region30: #{tpu_custom_call.1} parent=5 // pred_check_branch
        %182 = sbr.rel (%p179) target = $region32
      $region31: #{tpu_custom_call.1} parent=5 // pred_region
        %s183 = ssub.s32 %s12, 1
        %s184 = smul.u32 8, %s22
        %p185 = scmp.lt.s32.totalorder %s21, 1
        %s186 = scalar_select %p185, %s21, 1
        %p187 = scmp.lt.s32.totalorder %s184, 7
        %s188 = scalar_select %p187, %s184, 7
        %s189 = smul.addr %s186, 8
        %s190 = sadd.s32 %s188, %s189
        %s191 = smul.addr %s190, 8
        %s192 = scalar_lea.vmem %s0, %s191
        %p193 = pneg %p52
        %p194 = pneg %p49
        %p195 = scmp.lt.s32.totalorder %s21, 1
        %s196 = scalar_select %p195, %s21, 1
        %s197 = smul.addr %s196, 4
        %s198 = scalar_lea.vmem %s1, %s197
        %p199 = pneg %p78
        %p200 = pneg %p75
        %p201 = scmp.lt.s32.totalorder %s21, 1
        %s202 = scalar_select %p201, %s21, 1
        %s203 = scalar_lea.vmem %s2, %s202
        %p204 = pneg %p104
        %p205 = pneg %p101
        %p206 = pneg %p132
        %p207 = pneg %p129
        %s208 = sand.u32 %s119, 1
        %s209 = scalar_lea.sflag [#allocation3], %s208
        %s210 = sand.u32 %s119, 1
        %s211 = smul.addr %s210, 8
        %s212 = scalar_lea.vmem [#allocation2], %s211
        %s213 = smul.u32 8, %s22
        %p214 = scmp.lt.s32.totalorder %s21, 1
        %s215 = scalar_select %p214, %s21, 1
        %p216 = scmp.lt.s32.totalorder %s213, 7
        %s217 = scalar_select %p216, %s213, 7
        %s218 = smul.addr %s215, 8
        %s219 = sadd.s32 %s217, %s218
        %s220 = smul.addr %s219, 8
        %s221 = scalar_lea.vmem %s0, %s220
        %s222 = smul.u32 8, %s22
        %p223 = scmp.lt.s32.totalorder %s21, 1
        %s224 = scalar_select %p223, %s21, 1
        %s225 = smul.addr %s224, 4
        %s226 = scalar_lea.vmem %s1, %s225
        %p227 = scmp.lt.s32.totalorder %s21, 1
        %s228 = scalar_select %p227, %s21, 1
        %s229 = scalar_lea.vmem %s2, %s228
        %s230 = smul.u32 %s22, 64
        %v231 = vld [vmem:[%s221] sm:$0xff]
        %v232 = vld [vmem:[%s221 + $0x8] sm:$0xff]
        %v233 = vld [vmem:[%s221 + $0x10] sm:$0xff]
        %v234 = vld [vmem:[%s221 + $0x18] sm:$0xff]
        %v235 = vld [vmem:[%s221 + $0x20] sm:$0xff]
        %v236 = vld [vmem:[%s221 + $0x28] sm:$0xff]
        %v237 = vld [vmem:[%s221 + $0x30] sm:$0xff]
        %v238 = vld [vmem:[%s221 + $0x38] sm:$0xff]
        %v239 = vld [vmem:[%s226] sm:$0x7]
        %v240 = vld [vmem:[%s229] sm:$0x1]
        %vm241 = vcmask 23552
        %v243 = vsel %vm241, %v231, 0
        %v246 = vsel %vm241, %v232, 0
        %v249 = vsel %vm241, %v233, 0
        %v252 = vsel %vm241, %v234, 0
        %v255 = vsel %vm241, %v235, 0
        %v258 = vsel %vm241, %v236, 0
        %v261 = vsel %vm241, %v237, 0
        %v264 = vsel %vm241, %v238, 0
        %vm266 = vcmask 1042432
        %v268 = vsel %vm266, %v239, 0
        %270 = vmatprep.subr.mxu0 0.0
        %271 = vmatpush1.msra.mxu0 0.0
        %272 = vmatprep.subr.mxu0 0.0
        %273 = vmatpush1.msra.mxu0 0.0
        %274 = vmatprep.subr.mxu0 0.0
        %275 = vmatpush1.msra.mxu0 0.0
        %276 = vmatprep.subr.mxu0 0.0
        %277 = vmatpush1.msra.mxu0 0.0
        %278 = vmatprep.subr.mxu0 0.0
        %279 = vmatpush1.msra.mxu0 0.0
        %280 = vmatprep.subr.mxu0 0.0
        %281 = vmatpush1.msra.mxu0 0.0
        %282 = vmatprep.subr.mxu0 0.0
        %283 = vmatpush1.msra.mxu0 0.0
        %284 = vmatprep.subr.mxu0 0.0
        %285 = vmatpush1.msra.mxu0 0.0
        %286 = vmatprep.subr.mxu0 0.0
        %287 = vmatpush1.msra.mxu0 0.0
        %288 = vmatprep.subr.mxu0 0.0
        %289 = vmatpush1.msra.mxu0 0.0
        %290 = vmatprep.subr.mxu0 0.0
        %291 = vmatpush1.msra.mxu0 0.0
        %292 = vmatprep.subr.mxu0 0.0
        %293 = vmatpush1.msra.mxu0 0.0
        %294 = vmatprep.subr.mxu0 0.0
        %295 = vmatpush1.msra.mxu0 0.0
        %296 = vmatprep.subr.mxu0 0.0
        %297 = vmatpush1.msra.mxu0 0.0
        %298 = vmatprep.subr.mxu0 0.0
        %299 = vmatpush1.msra.mxu0 0.0
        %300 = vmatprep.subr.mxu0 0.0
        %v301 = vand.u32 %v268, 4294901760
        %302 = vmatpush1.msra.mxu0 %v301
        %303 = vmatprep.subr.mxu0 0.0
        %304 = vmatpush2.msra.mxu0 0.0
        %305 = vmatprep.subr.mxu0 0.0
        %306 = vmatpush2.msra.mxu0 0.0
        %307 = vmatprep.subr.mxu0 0.0
        %308 = vmatpush2.msra.mxu0 0.0
        %309 = vmatprep.subr.mxu0 0.0
        %310 = vmatpush2.msra.mxu0 0.0
        %311 = vmatprep.subr.mxu0 0.0
        %312 = vmatpush2.msra.mxu0 0.0
        %313 = vmatprep.subr.mxu0 0.0
        %314 = vmatpush2.msra.mxu0 0.0
        %315 = vmatprep.subr.mxu0 0.0
        %316 = vmatpush2.msra.mxu0 0.0
        %317 = vmatprep.subr.mxu0 0.0
        %318 = vmatpush2.msra.mxu0 0.0
        %319 = vmatprep.subr.mxu0 0.0
        %320 = vmatpush2.msra.mxu0 0.0
        %321 = vmatprep.subr.mxu0 0.0
        %322 = vmatpush2.msra.mxu0 0.0
        %323 = vmatprep.subr.mxu0 0.0
        %324 = vmatpush2.msra.mxu0 0.0
        %325 = vmatprep.subr.mxu0 0.0
        %326 = vmatpush2.msra.mxu0 0.0
        %327 = vmatprep.subr.mxu0 0.0
        %328 = vmatpush2.msra.mxu0 0.0
        %329 = vmatprep.subr.mxu0 0.0
        %330 = vmatpush2.msra.mxu0 0.0
        %331 = vmatprep.subr.mxu0 0.0
        %332 = vmatpush2.msra.mxu0 0.0
        %333 = vmatprep.subr.mxu0 0.0
        %334 = vmatpush2.msra.mxu0 0.0
        %335 = vmatprep.mubr.f32.mxu0 0.0
        %v336 = vand.u32 %v243, 4294901760
        %v337 = vsub.f32 %v243, %v336
        %v338 = vand.u32 %v337, 4294901760
        %v339 = vsub.f32 %v337, %v338
        %v340 = vand.u32 %v339, 4294901760
        %341 = vmatmul.mubr.f32.gmra.mxu0 %v340
        %v342 = vpop.f32.mrf.mxu0
        %v343 = vadd.f32 0.0, %v342
        %v344 = vpop.f32.mrf.mxu0
        %345 = vmatprep.mubr.f32.mxu0 0.0
        %v346 = vand.u32 %v246, 4294901760
        %v347 = vsub.f32 %v246, %v346
        %v348 = vand.u32 %v347, 4294901760
        %v349 = vsub.f32 %v347, %v348
        %v350 = vand.u32 %v349, 4294901760
        %351 = vmatmul.mubr.f32.gmra.mxu0 %v350
        %v352 = vpop.f32.mrf.mxu0
        %v353 = vadd.f32 0.0, %v352
        %v354 = vpop.f32.mrf.mxu0
        %355 = vmatprep.mubr.f32.mxu0 0.0
        %v356 = vand.u32 %v249, 4294901760
        %v357 = vsub.f32 %v249, %v356
        %v358 = vand.u32 %v357, 4294901760
        %v359 = vsub.f32 %v357, %v358
        %v360 = vand.u32 %v359, 4294901760
        %361 = vmatmul.mubr.f32.gmra.mxu0 %v360
        %v362 = vpop.f32.mrf.mxu0
        %v363 = vadd.f32 0.0, %v362
        %v364 = vpop.f32.mrf.mxu0
        %365 = vmatprep.mubr.f32.mxu0 0.0
        %v366 = vand.u32 %v252, 4294901760
        %v367 = vsub.f32 %v252, %v366
        %v368 = vand.u32 %v367, 4294901760
        %v369 = vsub.f32 %v367, %v368
        %v370 = vand.u32 %v369, 4294901760
        %371 = vmatmul.mubr.f32.gmra.mxu0 %v370
        %v372 = vpop.f32.mrf.mxu0
        %v373 = vadd.f32 0.0, %v372
        %v374 = vpop.f32.mrf.mxu0
        %375 = vmatprep.mubr.f32.mxu0 0.0
        %v376 = vand.u32 %v255, 4294901760
        %v377 = vsub.f32 %v255, %v376
        %v378 = vand.u32 %v377, 4294901760
        %v379 = vsub.f32 %v377, %v378
        %v380 = vand.u32 %v379, 4294901760
        %381 = vmatmul.mubr.f32.gmra.mxu0 %v380
        %v382 = vpop.f32.mrf.mxu0
        %v383 = vadd.f32 0.0, %v382
        %v384 = vpop.f32.mrf.mxu0
        %385 = vmatprep.mubr.f32.mxu0 0.0
        %v386 = vand.u32 %v258, 4294901760
        %v387 = vsub.f32 %v258, %v386
        %v388 = vand.u32 %v387, 4294901760
        %v389 = vsub.f32 %v387, %v388
        %v390 = vand.u32 %v389, 4294901760
        %391 = vmatmul.mubr.f32.gmra.mxu0 %v390
        %v392 = vpop.f32.mrf.mxu0
        %v393 = vadd.f32 0.0, %v392
        %v394 = vpop.f32.mrf.mxu0
        %395 = vmatprep.mubr.f32.mxu0 0.0
        %v396 = vand.u32 %v261, 4294901760
        %v397 = vsub.f32 %v261, %v396
        %v398 = vand.u32 %v397, 4294901760
        %v399 = vsub.f32 %v397, %v398
        %v400 = vand.u32 %v399, 4294901760
        %401 = vmatmul.mubr.f32.gmra.mxu0 %v400
        %v402 = vpop.f32.mrf.mxu0
        %v403 = vadd.f32 0.0, %v402
        %v404 = vpop.f32.mrf.mxu0
        %405 = vmatprep.mubr.f32.mxu0 0.0
        %v406 = vand.u32 %v264, 4294901760
        %v407 = vsub.f32 %v264, %v406
        %v408 = vand.u32 %v407, 4294901760
        %v409 = vsub.f32 %v407, %v408
        %v410 = vand.u32 %v409, 4294901760
        %411 = vmatmul.mubr.f32.gmra.mxu0 %v410
        %v412 = vpop.f32.mrf.mxu0
        %v413 = vadd.f32 0.0, %v412
        %v414 = vpop.f32.mrf.mxu0
        %415 = vdwg.mxu0
        %416 = vmatprep.subr.mxu0 0.0
        %417 = vmatpush1.msra.mxu0 0.0
        %418 = vmatprep.subr.mxu0 0.0
        %419 = vmatpush1.msra.mxu0 0.0
        %420 = vmatprep.subr.mxu0 0.0
        %421 = vmatpush1.msra.mxu0 0.0
        %422 = vmatprep.subr.mxu0 0.0
        %423 = vmatpush1.msra.mxu0 0.0
        %424 = vmatprep.subr.mxu0 0.0
        %425 = vmatpush1.msra.mxu0 0.0
        %426 = vmatprep.subr.mxu0 0.0
        %427 = vmatpush1.msra.mxu0 0.0
        %428 = vmatprep.subr.mxu0 0.0
        %429 = vmatpush1.msra.mxu0 0.0
        %430 = vmatprep.subr.mxu0 0.0
        %431 = vmatpush1.msra.mxu0 0.0
        %432 = vmatprep.subr.mxu0 0.0
        %433 = vmatpush1.msra.mxu0 0.0
        %434 = vmatprep.subr.mxu0 0.0
        %435 = vmatpush1.msra.mxu0 0.0
        %436 = vmatprep.subr.mxu0 0.0
        %437 = vmatpush1.msra.mxu0 0.0
        %438 = vmatprep.subr.mxu0 0.0
        %439 = vmatpush1.msra.mxu0 0.0
        %440 = vmatprep.subr.mxu0 0.0
        %441 = vmatpush1.msra.mxu0 0.0
        %442 = vmatprep.subr.mxu0 0.0
        %443 = vmatpush1.msra.mxu0 0.0
        %444 = vmatprep.subr.mxu0 0.0
        %445 = vmatpush1.msra.mxu0 0.0
        %446 = vmatprep.subr.mxu0 0.0
        %v447 = vand.u32 %v268, 4294901760
        %v448 = vsub.f32 %v268, %v447
        %v449 = vand.u32 %v448, 4294901760
        %v450 = vsub.f32 %v448, %v449
        %v451 = vand.u32 %v450, 4294901760
        %452 = vmatpush1.msra.mxu0 %v451
        %453 = vmatprep.subr.mxu0 0.0
        %454 = vmatpush2.msra.mxu0 0.0
        %455 = vmatprep.subr.mxu0 0.0
        %456 = vmatpush2.msra.mxu0 0.0
        %457 = vmatprep.subr.mxu0 0.0
        %458 = vmatpush2.msra.mxu0 0.0
        %459 = vmatprep.subr.mxu0 0.0
        %460 = vmatpush2.msra.mxu0 0.0
        %461 = vmatprep.subr.mxu0 0.0
        %462 = vmatpush2.msra.mxu0 0.0
        %463 = vmatprep.subr.mxu0 0.0
        %464 = vmatpush2.msra.mxu0 0.0
        %465 = vmatprep.subr.mxu0 0.0
        %466 = vmatpush2.msra.mxu0 0.0
        %467 = vmatprep.subr.mxu0 0.0
        %468 = vmatpush2.msra.mxu0 0.0
        %469 = vmatprep.subr.mxu0 0.0
        %470 = vmatpush2.msra.mxu0 0.0
        %471 = vmatprep.subr.mxu0 0.0
        %472 = vmatpush2.msra.mxu0 0.0
        %473 = vmatprep.subr.mxu0 0.0
        %474 = vmatpush2.msra.mxu0 0.0
        %475 = vmatprep.subr.mxu0 0.0
        %476 = vmatpush2.msra.mxu0 0.0
        %477 = vmatprep.subr.mxu0 0.0
        %478 = vmatpush2.msra.mxu0 0.0
        %479 = vmatprep.subr.mxu0 0.0
        %480 = vmatpush2.msra.mxu0 0.0
        %481 = vmatprep.subr.mxu0 0.0
        %482 = vmatpush2.msra.mxu0 0.0
        %483 = vmatprep.subr.mxu0 0.0
        %484 = vmatpush2.msra.mxu0 0.0
        %485 = vmatprep.mubr.f32.mxu0 0.0
        %v486 = vand.u32 %v243, 4294901760
        %487 = vmatmul.mubr.f32.gmra.mxu0 %v486
        %v488 = vpop.f32.mrf.mxu0
        %v489 = vadd.f32 %v343, %v488
        %v490 = vpop.f32.mrf.mxu0
        %491 = vmatprep.mubr.f32.mxu0 0.0
        %v492 = vand.u32 %v246, 4294901760
        %493 = vmatmul.mubr.f32.gmra.mxu0 %v492
        %v494 = vpop.f32.mrf.mxu0
        %v495 = vadd.f32 %v353, %v494
        %v496 = vpop.f32.mrf.mxu0
        %497 = vmatprep.mubr.f32.mxu0 0.0
        %v498 = vand.u32 %v249, 4294901760
        %499 = vmatmul.mubr.f32.gmra.mxu0 %v498
        %v500 = vpop.f32.mrf.mxu0
        %v501 = vadd.f32 %v363, %v500
        %v502 = vpop.f32.mrf.mxu0
        %503 = vmatprep.mubr.f32.mxu0 0.0
        %v504 = vand.u32 %v252, 4294901760
        %505 = vmatmul.mubr.f32.gmra.mxu0 %v504
        %v506 = vpop.f32.mrf.mxu0
        %v507 = vadd.f32 %v373, %v506
        %v508 = vpop.f32.mrf.mxu0
        %509 = vmatprep.mubr.f32.mxu0 0.0
        %v510 = vand.u32 %v255, 4294901760
        %511 = vmatmul.mubr.f32.gmra.mxu0 %v510
        %v512 = vpop.f32.mrf.mxu0
        %v513 = vadd.f32 %v383, %v512
        %v514 = vpop.f32.mrf.mxu0
        %515 = vmatprep.mubr.f32.mxu0 0.0
        %v516 = vand.u32 %v258, 4294901760
        %517 = vmatmul.mubr.f32.gmra.mxu0 %v516
        %v518 = vpop.f32.mrf.mxu0
        %v519 = vadd.f32 %v393, %v518
        %v520 = vpop.f32.mrf.mxu0
        %521 = vmatprep.mubr.f32.mxu0 0.0
        %v522 = vand.u32 %v261, 4294901760
        %523 = vmatmul.mubr.f32.gmra.mxu0 %v522
        %v524 = vpop.f32.mrf.mxu0
        %v525 = vadd.f32 %v403, %v524
        %v526 = vpop.f32.mrf.mxu0
        %527 = vmatprep.mubr.f32.mxu0 0.0
        %v528 = vand.u32 %v264, 4294901760
        %529 = vmatmul.mubr.f32.gmra.mxu0 %v528
        %v530 = vpop.f32.mrf.mxu0
        %v531 = vadd.f32 %v413, %v530
        %v532 = vpop.f32.mrf.mxu0
        %533 = vdwg.mxu0
        %534 = vmatprep.subr.mxu0 0.0
        %535 = vmatpush1.msra.mxu0 0.0
        %536 = vmatprep.subr.mxu0 0.0
        %537 = vmatpush1.msra.mxu0 0.0
        %538 = vmatprep.subr.mxu0 0.0
        %539 = vmatpush1.msra.mxu0 0.0
        %540 = vmatprep.subr.mxu0 0.0
        %541 = vmatpush1.msra.mxu0 0.0
        %542 = vmatprep.subr.mxu0 0.0
        %543 = vmatpush1.msra.mxu0 0.0
        %544 = vmatprep.subr.mxu0 0.0
        %545 = vmatpush1.msra.mxu0 0.0
        %546 = vmatprep.subr.mxu0 0.0
        %547 = vmatpush1.msra.mxu0 0.0
        %548 = vmatprep.subr.mxu0 0.0
        %549 = vmatpush1.msra.mxu0 0.0
        %550 = vmatprep.subr.mxu0 0.0
        %551 = vmatpush1.msra.mxu0 0.0
        %552 = vmatprep.subr.mxu0 0.0
        %553 = vmatpush1.msra.mxu0 0.0
        %554 = vmatprep.subr.mxu0 0.0
        %555 = vmatpush1.msra.mxu0 0.0
        %556 = vmatprep.subr.mxu0 0.0
        %557 = vmatpush1.msra.mxu0 0.0
        %558 = vmatprep.subr.mxu0 0.0
        %559 = vmatpush1.msra.mxu0 0.0
        %560 = vmatprep.subr.mxu0 0.0
        %561 = vmatpush1.msra.mxu0 0.0
        %562 = vmatprep.subr.mxu0 0.0
        %563 = vmatpush1.msra.mxu0 0.0
        %564 = vmatprep.subr.mxu0 0.0
        %v565 = vand.u32 %v268, 4294901760
        %v566 = vsub.f32 %v268, %v565
        %567 = vmatpush1.msra.mxu0 %v566
        %568 = vmatprep.subr.mxu0 0.0
        %569 = vmatpush2.msra.mxu0 0.0
        %570 = vmatprep.subr.mxu0 0.0
        %571 = vmatpush2.msra.mxu0 0.0
        %572 = vmatprep.subr.mxu0 0.0
        %573 = vmatpush2.msra.mxu0 0.0
        %574 = vmatprep.subr.mxu0 0.0
        %575 = vmatpush2.msra.mxu0 0.0
        %576 = vmatprep.subr.mxu0 0.0
        %577 = vmatpush2.msra.mxu0 0.0
        %578 = vmatprep.subr.mxu0 0.0
        %579 = vmatpush2.msra.mxu0 0.0
        %580 = vmatprep.subr.mxu0 0.0
        %581 = vmatpush2.msra.mxu0 0.0
        %582 = vmatprep.subr.mxu0 0.0
        %583 = vmatpush2.msra.mxu0 0.0
        %584 = vmatprep.subr.mxu0 0.0
        %585 = vmatpush2.msra.mxu0 0.0
        %586 = vmatprep.subr.mxu0 0.0
        %587 = vmatpush2.msra.mxu0 0.0
        %588 = vmatprep.subr.mxu0 0.0
        %589 = vmatpush2.msra.mxu0 0.0
        %590 = vmatprep.subr.mxu0 0.0
        %591 = vmatpush2.msra.mxu0 0.0
        %592 = vmatprep.subr.mxu0 0.0
        %593 = vmatpush2.msra.mxu0 0.0
        %594 = vmatprep.subr.mxu0 0.0
        %595 = vmatpush2.msra.mxu0 0.0
        %596 = vmatprep.subr.mxu0 0.0
        %597 = vmatpush2.msra.mxu0 0.0
        %598 = vmatprep.subr.mxu0 0.0
        %599 = vmatpush2.msra.mxu0 0.0
        %600 = vmatprep.mubr.f32.mxu0 0.0
        %v601 = vand.u32 %v243, 4294901760
        %v602 = vsub.f32 %v243, %v601
        %603 = vmatmul.mubr.f32.gmra.mxu0 %v602
        %v604 = vpop.f32.mrf.mxu0
        %v605 = vadd.f32 %v489, %v604
        %v606 = vpop.f32.mrf.mxu0
        %607 = vmatprep.mubr.f32.mxu0 0.0
        %v608 = vand.u32 %v246, 4294901760
        %v609 = vsub.f32 %v246, %v608
        %610 = vmatmul.mubr.f32.gmra.mxu0 %v609
        %v611 = vpop.f32.mrf.mxu0
        %v612 = vadd.f32 %v495, %v611
        %v613 = vpop.f32.mrf.mxu0
        %614 = vmatprep.mubr.f32.mxu0 0.0
        %v615 = vand.u32 %v249, 4294901760
        %v616 = vsub.f32 %v249, %v615
        %617 = vmatmul.mubr.f32.gmra.mxu0 %v616
        %v618 = vpop.f32.mrf.mxu0
        %v619 = vadd.f32 %v501, %v618
        %v620 = vpop.f32.mrf.mxu0
        %621 = vmatprep.mubr.f32.mxu0 0.0
        %v622 = vand.u32 %v252, 4294901760
        %v623 = vsub.f32 %v252, %v622
        %624 = vmatmul.mubr.f32.gmra.mxu0 %v623
        %v625 = vpop.f32.mrf.mxu0
        %v626 = vadd.f32 %v507, %v625
        %v627 = vpop.f32.mrf.mxu0
        %628 = vmatprep.mubr.f32.mxu0 0.0
        %v629 = vand.u32 %v255, 4294901760
        %v630 = vsub.f32 %v255, %v629
        %631 = vmatmul.mubr.f32.gmra.mxu0 %v630
        %v632 = vpop.f32.mrf.mxu0
        %v633 = vadd.f32 %v513, %v632
        %v634 = vpop.f32.mrf.mxu0
        %635 = vmatprep.mubr.f32.mxu0 0.0
        %v636 = vand.u32 %v258, 4294901760
        %v637 = vsub.f32 %v258, %v636
        %638 = vmatmul.mubr.f32.gmra.mxu0 %v637
        %v639 = vpop.f32.mrf.mxu0
        %v640 = vadd.f32 %v519, %v639
        %v641 = vpop.f32.mrf.mxu0
        %642 = vmatprep.mubr.f32.mxu0 0.0
        %v643 = vand.u32 %v261, 4294901760
        %v644 = vsub.f32 %v261, %v643
        %645 = vmatmul.mubr.f32.gmra.mxu0 %v644
        %v646 = vpop.f32.mrf.mxu0
        %v647 = vadd.f32 %v525, %v646
        %v648 = vpop.f32.mrf.mxu0
        %649 = vmatprep.mubr.f32.mxu0 0.0
        %v650 = vand.u32 %v264, 4294901760
        %v651 = vsub.f32 %v264, %v650
        %652 = vmatmul.mubr.f32.gmra.mxu0 %v651
        %v653 = vpop.f32.mrf.mxu0
        %v654 = vadd.f32 %v531, %v653
        %v655 = vpop.f32.mrf.mxu0
        %656 = vdwg.mxu0
        %657 = vmatprep.subr.mxu0 0.0
        %658 = vmatpush1.msra.mxu0 0.0
        %659 = vmatprep.subr.mxu0 0.0
        %660 = vmatpush1.msra.mxu0 0.0
        %661 = vmatprep.subr.mxu0 0.0
        %662 = vmatpush1.msra.mxu0 0.0
        %663 = vmatprep.subr.mxu0 0.0
        %664 = vmatpush1.msra.mxu0 0.0
        %665 = vmatprep.subr.mxu0 0.0
        %666 = vmatpush1.msra.mxu0 0.0
        %667 = vmatprep.subr.mxu0 0.0
        %668 = vmatpush1.msra.mxu0 0.0
        %669 = vmatprep.subr.mxu0 0.0
        %670 = vmatpush1.msra.mxu0 0.0
        %671 = vmatprep.subr.mxu0 0.0
        %672 = vmatpush1.msra.mxu0 0.0
        %673 = vmatprep.subr.mxu0 0.0
        %674 = vmatpush1.msra.mxu0 0.0
        %675 = vmatprep.subr.mxu0 0.0
        %676 = vmatpush1.msra.mxu0 0.0
        %677 = vmatprep.subr.mxu0 0.0
        %678 = vmatpush1.msra.mxu0 0.0
        %679 = vmatprep.subr.mxu0 0.0
        %680 = vmatpush1.msra.mxu0 0.0
        %681 = vmatprep.subr.mxu0 0.0
        %682 = vmatpush1.msra.mxu0 0.0
        %683 = vmatprep.subr.mxu0 0.0
        %684 = vmatpush1.msra.mxu0 0.0
        %685 = vmatprep.subr.mxu0 0.0
        %686 = vmatpush1.msra.mxu0 0.0
        %687 = vmatprep.subr.mxu0 0.0
        %v688 = vand.u32 %v268, 4294901760
        %689 = vmatpush1.msra.mxu0 %v688
        %690 = vmatprep.subr.mxu0 0.0
        %691 = vmatpush2.msra.mxu0 0.0
        %692 = vmatprep.subr.mxu0 0.0
        %693 = vmatpush2.msra.mxu0 0.0
        %694 = vmatprep.subr.mxu0 0.0
        %695 = vmatpush2.msra.mxu0 0.0
        %696 = vmatprep.subr.mxu0 0.0
        %697 = vmatpush2.msra.mxu0 0.0
        %698 = vmatprep.subr.mxu0 0.0
        %699 = vmatpush2.msra.mxu0 0.0
        %700 = vmatprep.subr.mxu0 0.0
        %701 = vmatpush2.msra.mxu0 0.0
        %702 = vmatprep.subr.mxu0 0.0
        %703 = vmatpush2.msra.mxu0 0.0
        %704 = vmatprep.subr.mxu0 0.0
        %705 = vmatpush2.msra.mxu0 0.0
        %706 = vmatprep.subr.mxu0 0.0
        %707 = vmatpush2.msra.mxu0 0.0
        %708 = vmatprep.subr.mxu0 0.0
        %709 = vmatpush2.msra.mxu0 0.0
        %710 = vmatprep.subr.mxu0 0.0
        %711 = vmatpush2.msra.mxu0 0.0
        %712 = vmatprep.subr.mxu0 0.0
        %713 = vmatpush2.msra.mxu0 0.0
        %714 = vmatprep.subr.mxu0 0.0
        %715 = vmatpush2.msra.mxu0 0.0
        %716 = vmatprep.subr.mxu0 0.0
        %717 = vmatpush2.msra.mxu0 0.0
        %718 = vmatprep.subr.mxu0 0.0
        %719 = vmatpush2.msra.mxu0 0.0
        %720 = vmatprep.subr.mxu0 0.0
        %721 = vmatpush2.msra.mxu0 0.0
        %722 = vmatprep.mubr.f32.mxu0 0.0
        %v723 = vand.u32 %v243, 4294901760
        %v724 = vsub.f32 %v243, %v723
        %v725 = vand.u32 %v724, 4294901760
        %726 = vmatmul.mubr.f32.gmra.mxu0 %v725
        %v727 = vpop.f32.mrf.mxu0
        %v728 = vadd.f32 %v605, %v727
        %v729 = vpop.f32.mrf.mxu0
        %730 = vmatprep.mubr.f32.mxu0 0.0
        %v731 = vand.u32 %v246, 4294901760
        %v732 = vsub.f32 %v246, %v731
        %v733 = vand.u32 %v732, 4294901760
        %734 = vmatmul.mubr.f32.gmra.mxu0 %v733
        %v735 = vpop.f32.mrf.mxu0
        %v736 = vadd.f32 %v612, %v735
        %v737 = vpop.f32.mrf.mxu0
        %738 = vmatprep.mubr.f32.mxu0 0.0
        %v739 = vand.u32 %v249, 4294901760
        %v740 = vsub.f32 %v249, %v739
        %v741 = vand.u32 %v740, 4294901760
        %742 = vmatmul.mubr.f32.gmra.mxu0 %v741
        %v743 = vpop.f32.mrf.mxu0
        %v744 = vadd.f32 %v619, %v743
        %v745 = vpop.f32.mrf.mxu0
        %746 = vmatprep.mubr.f32.mxu0 0.0
        %v747 = vand.u32 %v252, 4294901760
        %v748 = vsub.f32 %v252, %v747
        %v749 = vand.u32 %v748, 4294901760
        %750 = vmatmul.mubr.f32.gmra.mxu0 %v749
        %v751 = vpop.f32.mrf.mxu0
        %v752 = vadd.f32 %v626, %v751
        %v753 = vpop.f32.mrf.mxu0
        %754 = vmatprep.mubr.f32.mxu0 0.0
        %v755 = vand.u32 %v255, 4294901760
        %v756 = vsub.f32 %v255, %v755
        %v757 = vand.u32 %v756, 4294901760
        %758 = vmatmul.mubr.f32.gmra.mxu0 %v757
        %v759 = vpop.f32.mrf.mxu0
        %v760 = vadd.f32 %v633, %v759
        %v761 = vpop.f32.mrf.mxu0
        %762 = vmatprep.mubr.f32.mxu0 0.0
        %v763 = vand.u32 %v258, 4294901760
        %v764 = vsub.f32 %v258, %v763
        %v765 = vand.u32 %v764, 4294901760
        %766 = vmatmul.mubr.f32.gmra.mxu0 %v765
        %v767 = vpop.f32.mrf.mxu0
        %v768 = vadd.f32 %v640, %v767
        %v769 = vpop.f32.mrf.mxu0
        %770 = vmatprep.mubr.f32.mxu0 0.0
        %v771 = vand.u32 %v261, 4294901760
        %v772 = vsub.f32 %v261, %v771
        %v773 = vand.u32 %v772, 4294901760
        %774 = vmatmul.mubr.f32.gmra.mxu0 %v773
        %v775 = vpop.f32.mrf.mxu0
        %v776 = vadd.f32 %v647, %v775
        %v777 = vpop.f32.mrf.mxu0
        %778 = vmatprep.mubr.f32.mxu0 0.0
        %v779 = vand.u32 %v264, 4294901760
        %v780 = vsub.f32 %v264, %v779
        %v781 = vand.u32 %v780, 4294901760
        %782 = vmatmul.mubr.f32.gmra.mxu0 %v781
        %v783 = vpop.f32.mrf.mxu0
        %v784 = vadd.f32 %v654, %v783
        %v785 = vpop.f32.mrf.mxu0
        %786 = vdwg.mxu0
        %787 = vmatprep.subr.mxu0 0.0
        %788 = vmatpush1.msra.mxu0 0.0
        %789 = vmatprep.subr.mxu0 0.0
        %790 = vmatpush1.msra.mxu0 0.0
        %791 = vmatprep.subr.mxu0 0.0
        %792 = vmatpush1.msra.mxu0 0.0
        %793 = vmatprep.subr.mxu0 0.0
        %794 = vmatpush1.msra.mxu0 0.0
        %795 = vmatprep.subr.mxu0 0.0
        %796 = vmatpush1.msra.mxu0 0.0
        %797 = vmatprep.subr.mxu0 0.0
        %798 = vmatpush1.msra.mxu0 0.0
        %799 = vmatprep.subr.mxu0 0.0
        %800 = vmatpush1.msra.mxu0 0.0
        %801 = vmatprep.subr.mxu0 0.0
        %802 = vmatpush1.msra.mxu0 0.0
        %803 = vmatprep.subr.mxu0 0.0
        %804 = vmatpush1.msra.mxu0 0.0
        %805 = vmatprep.subr.mxu0 0.0
        %806 = vmatpush1.msra.mxu0 0.0
        %807 = vmatprep.subr.mxu0 0.0
        %808 = vmatpush1.msra.mxu0 0.0
        %809 = vmatprep.subr.mxu0 0.0
        %810 = vmatpush1.msra.mxu0 0.0
        %811 = vmatprep.subr.mxu0 0.0
        %812 = vmatpush1.msra.mxu0 0.0
        %813 = vmatprep.subr.mxu0 0.0
        %814 = vmatpush1.msra.mxu0 0.0
        %815 = vmatprep.subr.mxu0 0.0
        %816 = vmatpush1.msra.mxu0 0.0
        %817 = vmatprep.subr.mxu0 0.0
        %v818 = vand.u32 %v268, 4294901760
        %v819 = vsub.f32 %v268, %v818
        %v820 = vand.u32 %v819, 4294901760
        %821 = vmatpush1.msra.mxu0 %v820
        %822 = vmatprep.subr.mxu0 0.0
        %823 = vmatpush2.msra.mxu0 0.0
        %824 = vmatprep.subr.mxu0 0.0
        %825 = vmatpush2.msra.mxu0 0.0
        %826 = vmatprep.subr.mxu0 0.0
        %827 = vmatpush2.msra.mxu0 0.0
        %828 = vmatprep.subr.mxu0 0.0
        %829 = vmatpush2.msra.mxu0 0.0
        %830 = vmatprep.subr.mxu0 0.0
        %831 = vmatpush2.msra.mxu0 0.0
        %832 = vmatprep.subr.mxu0 0.0
        %833 = vmatpush2.msra.mxu0 0.0
        %834 = vmatprep.subr.mxu0 0.0
        %835 = vmatpush2.msra.mxu0 0.0
        %836 = vmatprep.subr.mxu0 0.0
        %837 = vmatpush2.msra.mxu0 0.0
        %838 = vmatprep.subr.mxu0 0.0
        %839 = vmatpush2.msra.mxu0 0.0
        %840 = vmatprep.subr.mxu0 0.0
        %841 = vmatpush2.msra.mxu0 0.0
        %842 = vmatprep.subr.mxu0 0.0
        %843 = vmatpush2.msra.mxu0 0.0
        %844 = vmatprep.subr.mxu0 0.0
        %845 = vmatpush2.msra.mxu0 0.0
        %846 = vmatprep.subr.mxu0 0.0
        %847 = vmatpush2.msra.mxu0 0.0
        %848 = vmatprep.subr.mxu0 0.0
        %849 = vmatpush2.msra.mxu0 0.0
        %850 = vmatprep.subr.mxu0 0.0
        %851 = vmatpush2.msra.mxu0 0.0
        %852 = vmatprep.subr.mxu0 0.0
        %853 = vmatpush2.msra.mxu0 0.0
        %854 = vmatprep.mubr.f32.mxu0 0.0
        %v855 = vand.u32 %v243, 4294901760
        %856 = vmatmul.mubr.f32.gmra.mxu0 %v855
        %v857 = vpop.f32.mrf.mxu0
        %v858 = vadd.f32 %v728, %v857
        %v859 = vpop.f32.mrf.mxu0
        %860 = vmatprep.mubr.f32.mxu0 0.0
        %v861 = vand.u32 %v246, 4294901760
        %862 = vmatmul.mubr.f32.gmra.mxu0 %v861
        %v863 = vpop.f32.mrf.mxu0
        %v864 = vadd.f32 %v736, %v863
        %v865 = vpop.f32.mrf.mxu0
        %866 = vmatprep.mubr.f32.mxu0 0.0
        %v867 = vand.u32 %v249, 4294901760
        %868 = vmatmul.mubr.f32.gmra.mxu0 %v867
        %v869 = vpop.f32.mrf.mxu0
        %v870 = vadd.f32 %v744, %v869
        %v871 = vpop.f32.mrf.mxu0
        %872 = vmatprep.mubr.f32.mxu0 0.0
        %v873 = vand.u32 %v252, 4294901760
        %874 = vmatmul.mubr.f32.gmra.mxu0 %v873
        %v875 = vpop.f32.mrf.mxu0
        %v876 = vadd.f32 %v752, %v875
        %v877 = vpop.f32.mrf.mxu0
        %878 = vmatprep.mubr.f32.mxu0 0.0
        %v879 = vand.u32 %v255, 4294901760
        %880 = vmatmul.mubr.f32.gmra.mxu0 %v879
        %v881 = vpop.f32.mrf.mxu0
        %v882 = vadd.f32 %v760, %v881
        %v883 = vpop.f32.mrf.mxu0
        %884 = vmatprep.mubr.f32.mxu0 0.0
        %v885 = vand.u32 %v258, 4294901760
        %886 = vmatmul.mubr.f32.gmra.mxu0 %v885
        %v887 = vpop.f32.mrf.mxu0
        %v888 = vadd.f32 %v768, %v887
        %v889 = vpop.f32.mrf.mxu0
        %890 = vmatprep.mubr.f32.mxu0 0.0
        %v891 = vand.u32 %v261, 4294901760
        %892 = vmatmul.mubr.f32.gmra.mxu0 %v891
        %v893 = vpop.f32.mrf.mxu0
        %v894 = vadd.f32 %v776, %v893
        %v895 = vpop.f32.mrf.mxu0
        %896 = vmatprep.mubr.f32.mxu0 0.0
        %v897 = vand.u32 %v264, 4294901760
        %898 = vmatmul.mubr.f32.gmra.mxu0 %v897
        %v899 = vpop.f32.mrf.mxu0
        %v900 = vadd.f32 %v784, %v899
        %v901 = vpop.f32.mrf.mxu0
        %902 = vdwg.mxu0
        %903 = vmatprep.subr.mxu0 0.0
        %904 = vmatpush1.msra.mxu0 0.0
        %905 = vmatprep.subr.mxu0 0.0
        %906 = vmatpush1.msra.mxu0 0.0
        %907 = vmatprep.subr.mxu0 0.0
        %908 = vmatpush1.msra.mxu0 0.0
        %909 = vmatprep.subr.mxu0 0.0
        %910 = vmatpush1.msra.mxu0 0.0
        %911 = vmatprep.subr.mxu0 0.0
        %912 = vmatpush1.msra.mxu0 0.0
        %913 = vmatprep.subr.mxu0 0.0
        %914 = vmatpush1.msra.mxu0 0.0
        %915 = vmatprep.subr.mxu0 0.0
        %916 = vmatpush1.msra.mxu0 0.0
        %917 = vmatprep.subr.mxu0 0.0
        %918 = vmatpush1.msra.mxu0 0.0
        %919 = vmatprep.subr.mxu0 0.0
        %920 = vmatpush1.msra.mxu0 0.0
        %921 = vmatprep.subr.mxu0 0.0
        %922 = vmatpush1.msra.mxu0 0.0
        %923 = vmatprep.subr.mxu0 0.0
        %924 = vmatpush1.msra.mxu0 0.0
        %925 = vmatprep.subr.mxu0 0.0
        %926 = vmatpush1.msra.mxu0 0.0
        %927 = vmatprep.subr.mxu0 0.0
        %928 = vmatpush1.msra.mxu0 0.0
        %929 = vmatprep.subr.mxu0 0.0
        %930 = vmatpush1.msra.mxu0 0.0
        %931 = vmatprep.subr.mxu0 0.0
        %932 = vmatpush1.msra.mxu0 0.0
        %933 = vmatprep.subr.mxu0 0.0
        %v934 = vand.u32 %v268, 4294901760
        %935 = vmatpush1.msra.mxu0 %v934
        %936 = vmatprep.subr.mxu0 0.0
        %937 = vmatpush2.msra.mxu0 0.0
        %938 = vmatprep.subr.mxu0 0.0
        %939 = vmatpush2.msra.mxu0 0.0
        %940 = vmatprep.subr.mxu0 0.0
        %941 = vmatpush2.msra.mxu0 0.0
        %942 = vmatprep.subr.mxu0 0.0
        %943 = vmatpush2.msra.mxu0 0.0
        %944 = vmatprep.subr.mxu0 0.0
        %945 = vmatpush2.msra.mxu0 0.0
        %946 = vmatprep.subr.mxu0 0.0
        %947 = vmatpush2.msra.mxu0 0.0
        %948 = vmatprep.subr.mxu0 0.0
        %949 = vmatpush2.msra.mxu0 0.0
        %950 = vmatprep.subr.mxu0 0.0
        %951 = vmatpush2.msra.mxu0 0.0
        %952 = vmatprep.subr.mxu0 0.0
        %953 = vmatpush2.msra.mxu0 0.0
        %954 = vmatprep.subr.mxu0 0.0
        %955 = vmatpush2.msra.mxu0 0.0
        %956 = vmatprep.subr.mxu0 0.0
        %957 = vmatpush2.msra.mxu0 0.0
        %958 = vmatprep.subr.mxu0 0.0
        %959 = vmatpush2.msra.mxu0 0.0
        %960 = vmatprep.subr.mxu0 0.0
        %961 = vmatpush2.msra.mxu0 0.0
        %962 = vmatprep.subr.mxu0 0.0
        %963 = vmatpush2.msra.mxu0 0.0
        %964 = vmatprep.subr.mxu0 0.0
        %965 = vmatpush2.msra.mxu0 0.0
        %966 = vmatprep.subr.mxu0 0.0
        %967 = vmatpush2.msra.mxu0 0.0
        %968 = vmatprep.mubr.f32.mxu0 0.0
        %v969 = vand.u32 %v243, 4294901760
        %970 = vmatmul.mubr.f32.gmra.mxu0 %v969
        %v971 = vpop.f32.mrf.mxu0
        %v972 = vadd.f32 %v858, %v971
        %v973 = vpop.f32.mrf.mxu0
        %974 = vmatprep.mubr.f32.mxu0 0.0
        %v975 = vand.u32 %v246, 4294901760
        %976 = vmatmul.mubr.f32.gmra.mxu0 %v975
        %v977 = vpop.f32.mrf.mxu0
        %v978 = vadd.f32 %v864, %v977
        %v979 = vpop.f32.mrf.mxu0
        %980 = vmatprep.mubr.f32.mxu0 0.0
        %v981 = vand.u32 %v249, 4294901760
        %982 = vmatmul.mubr.f32.gmra.mxu0 %v981
        %v983 = vpop.f32.mrf.mxu0
        %v984 = vadd.f32 %v870, %v983
        %v985 = vpop.f32.mrf.mxu0
        %986 = vmatprep.mubr.f32.mxu0 0.0
        %v987 = vand.u32 %v252, 4294901760
        %988 = vmatmul.mubr.f32.gmra.mxu0 %v987
        %v989 = vpop.f32.mrf.mxu0
        %v990 = vadd.f32 %v876, %v989
        %v991 = vpop.f32.mrf.mxu0
        %992 = vmatprep.mubr.f32.mxu0 0.0
        %v993 = vand.u32 %v255, 4294901760
        %994 = vmatmul.mubr.f32.gmra.mxu0 %v993
        %v995 = vpop.f32.mrf.mxu0
        %v996 = vadd.f32 %v882, %v995
        %v997 = vpop.f32.mrf.mxu0
        %998 = vmatprep.mubr.f32.mxu0 0.0
        %v999 = vand.u32 %v258, 4294901760
        %1000 = vmatmul.mubr.f32.gmra.mxu0 %v999
        %v1001 = vpop.f32.mrf.mxu0
        %v1002 = vadd.f32 %v888, %v1001
        %v1003 = vpop.f32.mrf.mxu0
        %1004 = vmatprep.mubr.f32.mxu0 0.0
        %v1005 = vand.u32 %v261, 4294901760
        %1006 = vmatmul.mubr.f32.gmra.mxu0 %v1005
        %v1007 = vpop.f32.mrf.mxu0
        %v1008 = vadd.f32 %v894, %v1007
        %v1009 = vpop.f32.mrf.mxu0
        %1010 = vmatprep.mubr.f32.mxu0 0.0
        %v1011 = vand.u32 %v264, 4294901760
        %1012 = vmatmul.mubr.f32.gmra.mxu0 %v1011
        %v1013 = vpop.f32.mrf.mxu0
        %v1014 = vadd.f32 %v900, %v1013
        %v1015 = vpop.f32.mrf.mxu0
        %1016 = vdwg.mxu0
        %v1017 = vmul.f32 %v231, %v231
        %v1018 = vmul.f32 %v232, %v232
        %v1019 = vmul.f32 %v233, %v233
        %v1020 = vmul.f32 %v234, %v234
        %v1021 = vmul.f32 %v235, %v235
        %v1022 = vmul.f32 %v236, %v236
        %v1023 = vmul.f32 %v237, %v237
        %v1024 = vmul.f32 %v238, %v238
        %v1025 = vsel %vm241, %v1017, 0.0
        %1026 = vadd.xlane.f32.xlu0 %v1025
        %v1027 = vpop.xlane.xlu0 %1026
        %v1028 = vsel %vm241, %v1018, 0.0
        %1029 = vadd.xlane.f32.xlu0 %v1028
        %v1030 = vpop.xlane.xlu0 %1029
        %v1031 = vsel %vm241, %v1019, 0.0
        %1032 = vadd.xlane.f32.xlu0 %v1031
        %v1033 = vpop.xlane.xlu0 %1032
        %v1034 = vsel %vm241, %v1020, 0.0
        %1035 = vadd.xlane.f32.xlu0 %v1034
        %v1036 = vpop.xlane.xlu0 %1035
        %v1037 = vsel %vm241, %v1021, 0.0
        %1038 = vadd.xlane.f32.xlu0 %v1037
        %v1039 = vpop.xlane.xlu0 %1038
        %v1040 = vsel %vm241, %v1022, 0.0
        %1041 = vadd.xlane.f32.xlu0 %v1040
        %v1042 = vpop.xlane.xlu0 %1041
        %v1043 = vsel %vm241, %v1023, 0.0
        %1044 = vadd.xlane.f32.xlu0 %v1043
        %v1045 = vpop.xlane.xlu0 %1044
        %v1046 = vsel %vm241, %v1024, 0.0
        %1047 = vadd.xlane.f32.xlu0 %v1046
        %v1048 = vpop.xlane.xlu0 %1047
        %v1050 = vlaneseq
        %v1051 = vshrl.u32 %v1050, 7
        %v1052 = vsub.s32 0, %v1051
        %v1053 = vrot.slane %v240, %v1052
        %v1055 = vadd.f32 %v1027, %v1053
        %v1056 = vadd.f32 %v1030, %v1053
        %v1057 = vadd.f32 %v1033, %v1053
        %v1058 = vadd.f32 %v1036, %v1053
        %v1059 = vadd.f32 %v1039, %v1053
        %v1060 = vadd.f32 %v1042, %v1053
        %v1061 = vadd.f32 %v1045, %v1053
        %v1062 = vadd.f32 %v1048, %v1053
        %v1063 = vmul.f32 %v972, 2.0
        %v1064 = vmul.f32 %v978, 2.0
        %v1065 = vmul.f32 %v984, 2.0
        %v1066 = vmul.f32 %v990, 2.0
        %v1067 = vmul.f32 %v996, 2.0
        %v1068 = vmul.f32 %v1002, 2.0
        %v1069 = vmul.f32 %v1008, 2.0
        %v1070 = vmul.f32 %v1014, 2.0
        %v1071 = vsub.f32 %v1055, %v1063
        %v1072 = vsub.f32 %v1056, %v1064
        %v1073 = vsub.f32 %v1057, %v1065
        %v1074 = vsub.f32 %v1058, %v1066
        %v1075 = vsub.f32 %v1059, %v1067
        %v1076 = vsub.f32 %v1060, %v1068
        %v1077 = vsub.f32 %v1061, %v1069
        %v1078 = vsub.f32 %v1062, %v1070
        %v1079 = vmax.f32 %v1071, 0.0
        %v1080 = vmax.f32 %v1072, 0.0
        %v1081 = vmax.f32 %v1073, 0.0
        %v1082 = vmax.f32 %v1074, 0.0
        %v1083 = vmax.f32 %v1075, 0.0
        %v1084 = vmax.f32 %v1076, 0.0
        %v1085 = vmax.f32 %v1077, 0.0
        %v1086 = vmax.f32 %v1078, 0.0
        %v1087 = vlaneseq
        %v1088 = vand.u32 %v1087, 127
        %v1089 = vlaneseq
        %v1090 = vshrl.u32 %v1089, 7
        %v1091 = vadd.s32 %v1090, 8
        %v1092 = vadd.s32 %v1090, 16
        %v1093 = vadd.s32 %v1090, 24
        %v1094 = vadd.s32 %v1090, 32
        %v1095 = vadd.s32 %v1090, 40
        %v1096 = vadd.s32 %v1090, 48
        %v1097 = vadd.s32 %v1090, 56
        %v1098 = vstv %s230
        %v1099 = vadd.s32 %v1098, %v1090
        %v1100 = vadd.s32 %v1098, %v1091
        %v1101 = vadd.s32 %v1098, %v1092
        %v1102 = vadd.s32 %v1098, %v1093
        %v1103 = vadd.s32 %v1098, %v1094
        %v1104 = vadd.s32 %v1098, %v1095
        %v1105 = vadd.s32 %v1098, %v1096
        %v1106 = vadd.s32 %v1098, %v1097
        %vm1107 = vcmp.eq.s32.totalorder %v1088, %v1099
        %vm1108 = vcmp.eq.s32.totalorder %v1088, %v1100
        %vm1109 = vcmp.eq.s32.totalorder %v1088, %v1101
        %vm1110 = vcmp.eq.s32.totalorder %v1088, %v1102
        %vm1111 = vcmp.eq.s32.totalorder %v1088, %v1103
        %vm1112 = vcmp.eq.s32.totalorder %v1088, %v1104
        %vm1113 = vcmp.eq.s32.totalorder %v1088, %v1105
        %vm1114 = vcmp.eq.s32.totalorder %v1088, %v1106
        %v1115 = vsel %vm1107, inf, %v1079
        %v1116 = vsel %vm1108, inf, %v1080
        %v1117 = vsel %vm1109, inf, %v1081
        %v1118 = vsel %vm1110, inf, %v1082
        %v1119 = vsel %vm1111, inf, %v1083
        %v1120 = vsel %vm1112, inf, %v1084
        %v1121 = vsel %vm1113, inf, %v1085
        %v1122 = vsel %vm1114, inf, %v1086
        %vm1123 = vcmask 523264
        %v1124 = vsel %vm1123, %v1115, inf
        %1125 = vmin.xlane.f32.xlu0 %v1124
        %v1126 = vpop.xlane.xlu0 %1125
        %v1127 = vsel %vm1123, %v1116, inf
        %1128 = vmin.xlane.f32.xlu0 %v1127
        %v1129 = vpop.xlane.xlu0 %1128
        %v1130 = vsel %vm1123, %v1117, inf
        %1131 = vmin.xlane.f32.xlu0 %v1130
        %v1132 = vpop.xlane.xlu0 %1131
        %v1133 = vsel %vm1123, %v1118, inf
        %1134 = vmin.xlane.f32.xlu0 %v1133
        %v1135 = vpop.xlane.xlu0 %1134
        %v1136 = vsel %vm1123, %v1119, inf
        %1137 = vmin.xlane.f32.xlu0 %v1136
        %v1138 = vpop.xlane.xlu0 %1137
        %v1139 = vsel %vm1123, %v1120, inf
        %1140 = vmin.xlane.f32.xlu0 %v1139
        %v1141 = vpop.xlane.xlu0 %1140
        %v1142 = vsel %vm1123, %v1121, inf
        %1143 = vmin.xlane.f32.xlu0 %v1142
        %v1144 = vpop.xlane.xlu0 %1143
        %v1145 = vsel %vm1123, %v1122, inf
        %1146 = vmin.xlane.f32.xlu0 %v1145
        %v1147 = vpop.xlane.xlu0 %1146
        %vm1148 = vcmp.eq.f32.partialorder %v1115, %v1126
        %vm1149 = vcmp.eq.f32.partialorder %v1116, %v1129
        %vm1150 = vcmp.eq.f32.partialorder %v1117, %v1132
        %vm1151 = vcmp.eq.f32.partialorder %v1118, %v1135
        %vm1152 = vcmp.eq.f32.partialorder %v1119, %v1138
        %vm1153 = vcmp.eq.f32.partialorder %v1120, %v1141
        %vm1154 = vcmp.eq.f32.partialorder %v1121, %v1144
        %vm1155 = vcmp.eq.f32.partialorder %v1122, %v1147
        %v1156 = vsel %vm1148, %v1088, 64
        %v1157 = vsel %vm1149, %v1088, 64
        %v1158 = vsel %vm1150, %v1088, 64
        %v1159 = vsel %vm1151, %v1088, 64
        %v1160 = vsel %vm1152, %v1088, 64
        %v1161 = vsel %vm1153, %v1088, 64
        %v1162 = vsel %vm1154, %v1088, 64
        %v1163 = vsel %vm1155, %v1088, 64
        %v1164 = vsel %vm1123, %v1156, 2147483647
        %v1165 = vand.u32 %v1164, 65535
        %v1166 = vshra.s32 %v1164, 16
        %v1167 = vcvt.s32.f32 %v1165
        %v1168 = vcvt.s32.f32 %v1166
        %1169 = vmin.xlane.f32.xlu0 %v1168
        %v1170 = vpop.xlane.xlu0 %1169
        %vm1171 = vcmp.eq.f32.partialorder %v1168, %v1170
        %v1172 = vsel %vm1171, %v1167, inf
        %1173 = vmin.xlane.f32.xlu0 %v1172
        %v1174 = vpop.xlane.xlu0 %1173
        %v1175 = vcvt.f32.s32 %v1174
        %v1176 = vcvt.f32.s32 %v1170
        %v1177 = vshll.u32 %v1176, 16
        %v1178 = vadd.s32 %v1177, %v1175
        %v1179 = vsel %vm1123, %v1157, 2147483647
        %v1180 = vand.u32 %v1179, 65535
        %v1181 = vshra.s32 %v1179, 16
        %v1182 = vcvt.s32.f32 %v1180
        %v1183 = vcvt.s32.f32 %v1181
        %1184 = vmin.xlane.f32.xlu0 %v1183
        %v1185 = vpop.xlane.xlu0 %1184
        %vm1186 = vcmp.eq.f32.partialorder %v1183, %v1185
        %v1187 = vsel %vm1186, %v1182, inf
        %1188 = vmin.xlane.f32.xlu0 %v1187
        %v1189 = vpop.xlane.xlu0 %1188
        %v1190 = vcvt.f32.s32 %v1189
        %v1191 = vcvt.f32.s32 %v1185
        %v1192 = vshll.u32 %v1191, 16
        %v1193 = vadd.s32 %v1192, %v1190
        %v1194 = vsel %vm1123, %v1158, 2147483647
        %v1195 = vand.u32 %v1194, 65535
        %v1196 = vshra.s32 %v1194, 16
        %v1197 = vcvt.s32.f32 %v1195
        %v1198 = vcvt.s32.f32 %v1196
        %1199 = vmin.xlane.f32.xlu0 %v1198
        %v1200 = vpop.xlane.xlu0 %1199
        %vm1201 = vcmp.eq.f32.partialorder %v1198, %v1200
        %v1202 = vsel %vm1201, %v1197, inf
        %1203 = vmin.xlane.f32.xlu0 %v1202
        %v1204 = vpop.xlane.xlu0 %1203
        %v1205 = vcvt.f32.s32 %v1204
        %v1206 = vcvt.f32.s32 %v1200
        %v1207 = vshll.u32 %v1206, 16
        %v1208 = vadd.s32 %v1207, %v1205
        %v1209 = vsel %vm1123, %v1159, 2147483647
        %v1210 = vand.u32 %v1209, 65535
        %v1211 = vshra.s32 %v1209, 16
        %v1212 = vcvt.s32.f32 %v1210
        %v1213 = vcvt.s32.f32 %v1211
        %1214 = vmin.xlane.f32.xlu0 %v1213
        %v1215 = vpop.xlane.xlu0 %1214
        %vm1216 = vcmp.eq.f32.partialorder %v1213, %v1215
        %v1217 = vsel %vm1216, %v1212, inf
        %1218 = vmin.xlane.f32.xlu0 %v1217
        %v1219 = vpop.xlane.xlu0 %1218
        %v1220 = vcvt.f32.s32 %v1219
        %v1221 = vcvt.f32.s32 %v1215
        %v1222 = vshll.u32 %v1221, 16
        %v1223 = vadd.s32 %v1222, %v1220
        %v1224 = vsel %vm1123, %v1160, 2147483647
        %v1225 = vand.u32 %v1224, 65535
        %v1226 = vshra.s32 %v1224, 16
        %v1227 = vcvt.s32.f32 %v1225
        %v1228 = vcvt.s32.f32 %v1226
        %1229 = vmin.xlane.f32.xlu0 %v1228
        %v1230 = vpop.xlane.xlu0 %1229
        %vm1231 = vcmp.eq.f32.partialorder %v1228, %v1230
        %v1232 = vsel %vm1231, %v1227, inf
        %1233 = vmin.xlane.f32.xlu0 %v1232
        %v1234 = vpop.xlane.xlu0 %1233
        %v1235 = vcvt.f32.s32 %v1234
        %v1236 = vcvt.f32.s32 %v1230
        %v1237 = vshll.u32 %v1236, 16
        %v1238 = vadd.s32 %v1237, %v1235
        %v1239 = vsel %vm1123, %v1161, 2147483647
        %v1240 = vand.u32 %v1239, 65535
        %v1241 = vshra.s32 %v1239, 16
        %v1242 = vcvt.s32.f32 %v1240
        %v1243 = vcvt.s32.f32 %v1241
        %1244 = vmin.xlane.f32.xlu0 %v1243
        %v1245 = vpop.xlane.xlu0 %1244
        %vm1246 = vcmp.eq.f32.partialorder %v1243, %v1245
        %v1247 = vsel %vm1246, %v1242, inf
        %1248 = vmin.xlane.f32.xlu0 %v1247
        %v1249 = vpop.xlane.xlu0 %1248
        %v1250 = vcvt.f32.s32 %v1249
        %v1251 = vcvt.f32.s32 %v1245
        %v1252 = vshll.u32 %v1251, 16
        %v1253 = vadd.s32 %v1252, %v1250
        %v1254 = vsel %vm1123, %v1162, 2147483647
        %v1255 = vand.u32 %v1254, 65535
        %v1256 = vshra.s32 %v1254, 16
        %v1257 = vcvt.s32.f32 %v1255
        %v1258 = vcvt.s32.f32 %v1256
        %1259 = vmin.xlane.f32.xlu0 %v1258
        %v1260 = vpop.xlane.xlu0 %1259
        %vm1261 = vcmp.eq.f32.partialorder %v1258, %v1260
        %v1262 = vsel %vm1261, %v1257, inf
        %1263 = vmin.xlane.f32.xlu0 %v1262
        %v1264 = vpop.xlane.xlu0 %1263
        %v1265 = vcvt.f32.s32 %v1264
        %v1266 = vcvt.f32.s32 %v1260
        %v1267 = vshll.u32 %v1266, 16
        %v1268 = vadd.s32 %v1267, %v1265
        %v1269 = vsel %vm1123, %v1163, 2147483647
        %v1270 = vand.u32 %v1269, 65535
        %v1271 = vshra.s32 %v1269, 16
        %v1272 = vcvt.s32.f32 %v1270
        %v1273 = vcvt.s32.f32 %v1271
        %1274 = vmin.xlane.f32.xlu0 %v1273
        %v1275 = vpop.xlane.xlu0 %1274
        %vm1276 = vcmp.eq.f32.partialorder %v1273, %v1275
        %v1277 = vsel %vm1276, %v1272, inf
        %1278 = vmin.xlane.f32.xlu0 %v1277
        %v1279 = vpop.xlane.xlu0 %1278
        %v1280 = vcvt.f32.s32 %v1279
        %v1281 = vcvt.f32.s32 %v1275
        %v1282 = vshll.u32 %v1281, 16
        %v1283 = vadd.s32 %v1282, %v1280
        %vm1284 = vcmp.eq.s32.totalorder %v1088, %v1178
        %vm1285 = vcmp.eq.s32.totalorder %v1088, %v1193
        %vm1286 = vcmp.eq.s32.totalorder %v1088, %v1208
        %vm1287 = vcmp.eq.s32.totalorder %v1088, %v1223
        %vm1288 = vcmp.eq.s32.totalorder %v1088, %v1238
        %vm1289 = vcmp.eq.s32.totalorder %v1088, %v1253
        %vm1290 = vcmp.eq.s32.totalorder %v1088, %v1268
        %vm1291 = vcmp.eq.s32.totalorder %v1088, %v1283
        %v1292 = vsel %vm1284, inf, %v1115
        %v1293 = vsel %vm1285, inf, %v1116
        %v1294 = vsel %vm1286, inf, %v1117
        %v1295 = vsel %vm1287, inf, %v1118
        %v1296 = vsel %vm1288, inf, %v1119
        %v1297 = vsel %vm1289, inf, %v1120
        %v1298 = vsel %vm1290, inf, %v1121
        %v1299 = vsel %vm1291, inf, %v1122
        %v1300 = vsel %vm1123, %v1292, inf
        %1301 = vmin.xlane.f32.xlu0 %v1300
        %v1302 = vpop.xlane.xlu0 %1301
        %v1303 = vsel %vm1123, %v1293, inf
        %1304 = vmin.xlane.f32.xlu0 %v1303
        %v1305 = vpop.xlane.xlu0 %1304
        %v1306 = vsel %vm1123, %v1294, inf
        %1307 = vmin.xlane.f32.xlu0 %v1306
        %v1308 = vpop.xlane.xlu0 %1307
        %v1309 = vsel %vm1123, %v1295, inf
        %1310 = vmin.xlane.f32.xlu0 %v1309
        %v1311 = vpop.xlane.xlu0 %1310
        %v1312 = vsel %vm1123, %v1296, inf
        %1313 = vmin.xlane.f32.xlu0 %v1312
        %v1314 = vpop.xlane.xlu0 %1313
        %v1315 = vsel %vm1123, %v1297, inf
        %1316 = vmin.xlane.f32.xlu0 %v1315
        %v1317 = vpop.xlane.xlu0 %1316
        %v1318 = vsel %vm1123, %v1298, inf
        %1319 = vmin.xlane.f32.xlu0 %v1318
        %v1320 = vpop.xlane.xlu0 %1319
        %v1321 = vsel %vm1123, %v1299, inf
        %1322 = vmin.xlane.f32.xlu0 %v1321
        %v1323 = vpop.xlane.xlu0 %1322
        %vm1324 = vcmp.eq.f32.partialorder %v1292, %v1302
        %vm1325 = vcmp.eq.f32.partialorder %v1293, %v1305
        %vm1326 = vcmp.eq.f32.partialorder %v1294, %v1308
        %vm1327 = vcmp.eq.f32.partialorder %v1295, %v1311
        %vm1328 = vcmp.eq.f32.partialorder %v1296, %v1314
        %vm1329 = vcmp.eq.f32.partialorder %v1297, %v1317
        %vm1330 = vcmp.eq.f32.partialorder %v1298, %v1320
        %vm1331 = vcmp.eq.f32.partialorder %v1299, %v1323
        %v1332 = vsel %vm1324, %v1088, 64
        %v1333 = vsel %vm1325, %v1088, 64
        %v1334 = vsel %vm1326, %v1088, 64
        %v1335 = vsel %vm1327, %v1088, 64
        %v1336 = vsel %vm1328, %v1088, 64
        %v1337 = vsel %vm1329, %v1088, 64
        %v1338 = vsel %vm1330, %v1088, 64
        %v1339 = vsel %vm1331, %v1088, 64
        %v1340 = vsel %vm1123, %v1332, 2147483647
        %v1341 = vand.u32 %v1340, 65535
        %v1342 = vshra.s32 %v1340, 16
        %v1343 = vcvt.s32.f32 %v1341
        %v1344 = vcvt.s32.f32 %v1342
        %1345 = vmin.xlane.f32.xlu0 %v1344
        %v1346 = vpop.xlane.xlu0 %1345
        %vm1347 = vcmp.eq.f32.partialorder %v1344, %v1346
        %v1348 = vsel %vm1347, %v1343, inf
        %1349 = vmin.xlane.f32.xlu0 %v1348
        %v1350 = vpop.xlane.xlu0 %1349
        %v1351 = vcvt.f32.s32 %v1350
        %v1352 = vcvt.f32.s32 %v1346
        %v1353 = vshll.u32 %v1352, 16
        %v1354 = vadd.s32 %v1353, %v1351
        %v1355 = vsel %vm1123, %v1333, 2147483647
        %v1356 = vand.u32 %v1355, 65535
        %v1357 = vshra.s32 %v1355, 16
        %v1358 = vcvt.s32.f32 %v1356
        %v1359 = vcvt.s32.f32 %v1357
        %1360 = vmin.xlane.f32.xlu0 %v1359
        %v1361 = vpop.xlane.xlu0 %1360
        %vm1362 = vcmp.eq.f32.partialorder %v1359, %v1361
        %v1363 = vsel %vm1362, %v1358, inf
        %1364 = vmin.xlane.f32.xlu0 %v1363
        %v1365 = vpop.xlane.xlu0 %1364
        %v1366 = vcvt.f32.s32 %v1365
        %v1367 = vcvt.f32.s32 %v1361
        %v1368 = vshll.u32 %v1367, 16
        %v1369 = vadd.s32 %v1368, %v1366
        %v1370 = vsel %vm1123, %v1334, 2147483647
        %v1371 = vand.u32 %v1370, 65535
        %v1372 = vshra.s32 %v1370, 16
        %v1373 = vcvt.s32.f32 %v1371
        %v1374 = vcvt.s32.f32 %v1372
        %1375 = vmin.xlane.f32.xlu0 %v1374
        %v1376 = vpop.xlane.xlu0 %1375
        %vm1377 = vcmp.eq.f32.partialorder %v1374, %v1376
        %v1378 = vsel %vm1377, %v1373, inf
        %1379 = vmin.xlane.f32.xlu0 %v1378
        %v1380 = vpop.xlane.xlu0 %1379
        %v1381 = vcvt.f32.s32 %v1380
        %v1382 = vcvt.f32.s32 %v1376
        %v1383 = vshll.u32 %v1382, 16
        %v1384 = vadd.s32 %v1383, %v1381
        %v1385 = vsel %vm1123, %v1335, 2147483647
        %v1386 = vand.u32 %v1385, 65535
        %v1387 = vshra.s32 %v1385, 16
        %v1388 = vcvt.s32.f32 %v1386
        %v1389 = vcvt.s32.f32 %v1387
        %1390 = vmin.xlane.f32.xlu0 %v1389
        %v1391 = vpop.xlane.xlu0 %1390
        %vm1392 = vcmp.eq.f32.partialorder %v1389, %v1391
        %v1393 = vsel %vm1392, %v1388, inf
        %1394 = vmin.xlane.f32.xlu0 %v1393
        %v1395 = vpop.xlane.xlu0 %1394
        %v1396 = vcvt.f32.s32 %v1395
        %v1397 = vcvt.f32.s32 %v1391
        %v1398 = vshll.u32 %v1397, 16
        %v1399 = vadd.s32 %v1398, %v1396
        %v1400 = vsel %vm1123, %v1336, 2147483647
        %v1401 = vand.u32 %v1400, 65535
        %v1402 = vshra.s32 %v1400, 16
        %v1403 = vcvt.s32.f32 %v1401
        %v1404 = vcvt.s32.f32 %v1402
        %1405 = vmin.xlane.f32.xlu0 %v1404
        %v1406 = vpop.xlane.xlu0 %1405
        %vm1407 = vcmp.eq.f32.partialorder %v1404, %v1406
        %v1408 = vsel %vm1407, %v1403, inf
        %1409 = vmin.xlane.f32.xlu0 %v1408
        %v1410 = vpop.xlane.xlu0 %1409
        %v1411 = vcvt.f32.s32 %v1410
        %v1412 = vcvt.f32.s32 %v1406
        %v1413 = vshll.u32 %v1412, 16
        %v1414 = vadd.s32 %v1413, %v1411
        %v1415 = vsel %vm1123, %v1337, 2147483647
        %v1416 = vand.u32 %v1415, 65535
        %v1417 = vshra.s32 %v1415, 16
        %v1418 = vcvt.s32.f32 %v1416
        %v1419 = vcvt.s32.f32 %v1417
        %1420 = vmin.xlane.f32.xlu0 %v1419
        %v1421 = vpop.xlane.xlu0 %1420
        %vm1422 = vcmp.eq.f32.partialorder %v1419, %v1421
        %v1423 = vsel %vm1422, %v1418, inf
        %1424 = vmin.xlane.f32.xlu0 %v1423
        %v1425 = vpop.xlane.xlu0 %1424
        %v1426 = vcvt.f32.s32 %v1425
        %v1427 = vcvt.f32.s32 %v1421
        %v1428 = vshll.u32 %v1427, 16
        %v1429 = vadd.s32 %v1428, %v1426
        %v1430 = vsel %vm1123, %v1338, 2147483647
        %v1431 = vand.u32 %v1430, 65535
        %v1432 = vshra.s32 %v1430, 16
        %v1433 = vcvt.s32.f32 %v1431
        %v1434 = vcvt.s32.f32 %v1432
        %1435 = vmin.xlane.f32.xlu0 %v1434
        %v1436 = vpop.xlane.xlu0 %1435
        %vm1437 = vcmp.eq.f32.partialorder %v1434, %v1436
        %v1438 = vsel %vm1437, %v1433, inf
        %1439 = vmin.xlane.f32.xlu0 %v1438
        %v1440 = vpop.xlane.xlu0 %1439
        %v1441 = vcvt.f32.s32 %v1440
        %v1442 = vcvt.f32.s32 %v1436
        %v1443 = vshll.u32 %v1442, 16
        %v1444 = vadd.s32 %v1443, %v1441
        %v1445 = vsel %vm1123, %v1339, 2147483647
        %v1446 = vand.u32 %v1445, 65535
        %v1447 = vshra.s32 %v1445, 16
        %v1448 = vcvt.s32.f32 %v1446
        %v1449 = vcvt.s32.f32 %v1447
        %1450 = vmin.xlane.f32.xlu0 %v1449
        %v1451 = vpop.xlane.xlu0 %1450
        %vm1452 = vcmp.eq.f32.partialorder %v1449, %v1451
        %v1453 = vsel %vm1452, %v1448, inf
        %1454 = vmin.xlane.f32.xlu0 %v1453
        %v1455 = vpop.xlane.xlu0 %1454
        %v1456 = vcvt.f32.s32 %v1455
        %v1457 = vcvt.f32.s32 %v1451
        %v1458 = vshll.u32 %v1457, 16
        %v1459 = vadd.s32 %v1458, %v1456
        %vm1460 = vcmp.eq.s32.totalorder %v1088, %v1354
        %vm1461 = vcmp.eq.s32.totalorder %v1088, %v1369
        %vm1462 = vcmp.eq.s32.totalorder %v1088, %v1384
        %vm1463 = vcmp.eq.s32.totalorder %v1088, %v1399
        %vm1464 = vcmp.eq.s32.totalorder %v1088, %v1414
        %vm1465 = vcmp.eq.s32.totalorder %v1088, %v1429
        %vm1466 = vcmp.eq.s32.totalorder %v1088, %v1444
        %vm1467 = vcmp.eq.s32.totalorder %v1088, %v1459
        %v1468 = vsel %vm1460, inf, %v1292
        %v1469 = vsel %vm1461, inf, %v1293
        %v1470 = vsel %vm1462, inf, %v1294
        %v1471 = vsel %vm1463, inf, %v1295
        %v1472 = vsel %vm1464, inf, %v1296
        %v1473 = vsel %vm1465, inf, %v1297
        %v1474 = vsel %vm1466, inf, %v1298
        %v1475 = vsel %vm1467, inf, %v1299
        %v1476 = vsel %vm1123, %v1468, inf
        %1477 = vmin.xlane.f32.xlu0 %v1476
        %v1478 = vpop.xlane.xlu0 %1477
        %v1479 = vsel %vm1123, %v1469, inf
        %1480 = vmin.xlane.f32.xlu0 %v1479
        %v1481 = vpop.xlane.xlu0 %1480
        %v1482 = vsel %vm1123, %v1470, inf
        %1483 = vmin.xlane.f32.xlu0 %v1482
        %v1484 = vpop.xlane.xlu0 %1483
        %v1485 = vsel %vm1123, %v1471, inf
        %1486 = vmin.xlane.f32.xlu0 %v1485
        %v1487 = vpop.xlane.xlu0 %1486
        %v1488 = vsel %vm1123, %v1472, inf
        %1489 = vmin.xlane.f32.xlu0 %v1488
        %v1490 = vpop.xlane.xlu0 %1489
        %v1491 = vsel %vm1123, %v1473, inf
        %1492 = vmin.xlane.f32.xlu0 %v1491
        %v1493 = vpop.xlane.xlu0 %1492
        %v1494 = vsel %vm1123, %v1474, inf
        %1495 = vmin.xlane.f32.xlu0 %v1494
        %v1496 = vpop.xlane.xlu0 %1495
        %v1497 = vsel %vm1123, %v1475, inf
        %1498 = vmin.xlane.f32.xlu0 %v1497
        %v1499 = vpop.xlane.xlu0 %1498
        %vm1500 = vcmp.eq.f32.partialorder %v1468, %v1478
        %vm1501 = vcmp.eq.f32.partialorder %v1469, %v1481
        %vm1502 = vcmp.eq.f32.partialorder %v1470, %v1484
        %vm1503 = vcmp.eq.f32.partialorder %v1471, %v1487
        %vm1504 = vcmp.eq.f32.partialorder %v1472, %v1490
        %vm1505 = vcmp.eq.f32.partialorder %v1473, %v1493
        %vm1506 = vcmp.eq.f32.partialorder %v1474, %v1496
        %vm1507 = vcmp.eq.f32.partialorder %v1475, %v1499
        %v1508 = vsel %vm1500, %v1088, 64
        %v1509 = vsel %vm1501, %v1088, 64
        %v1510 = vsel %vm1502, %v1088, 64
        %v1511 = vsel %vm1503, %v1088, 64
        %v1512 = vsel %vm1504, %v1088, 64
        %v1513 = vsel %vm1505, %v1088, 64
        %v1514 = vsel %vm1506, %v1088, 64
        %v1515 = vsel %vm1507, %v1088, 64
        %v1516 = vsel %vm1123, %v1508, 2147483647
        %v1517 = vand.u32 %v1516, 65535
        %v1518 = vshra.s32 %v1516, 16
        %v1519 = vcvt.s32.f32 %v1517
        %v1520 = vcvt.s32.f32 %v1518
        %1521 = vmin.xlane.f32.xlu0 %v1520
        %v1522 = vpop.xlane.xlu0 %1521
        %vm1523 = vcmp.eq.f32.partialorder %v1520, %v1522
        %v1524 = vsel %vm1523, %v1519, inf
        %1525 = vmin.xlane.f32.xlu0 %v1524
        %v1526 = vpop.xlane.xlu0 %1525
        %v1527 = vcvt.f32.s32 %v1526
        %v1528 = vcvt.f32.s32 %v1522
        %v1529 = vshll.u32 %v1528, 16
        %v1530 = vadd.s32 %v1529, %v1527
        %v1531 = vsel %vm1123, %v1509, 2147483647
        %v1532 = vand.u32 %v1531, 65535
        %v1533 = vshra.s32 %v1531, 16
        %v1534 = vcvt.s32.f32 %v1532
        %v1535 = vcvt.s32.f32 %v1533
        %1536 = vmin.xlane.f32.xlu0 %v1535
        %v1537 = vpop.xlane.xlu0 %1536
        %vm1538 = vcmp.eq.f32.partialorder %v1535, %v1537
        %v1539 = vsel %vm1538, %v1534, inf
        %1540 = vmin.xlane.f32.xlu0 %v1539
        %v1541 = vpop.xlane.xlu0 %1540
        %v1542 = vcvt.f32.s32 %v1541
        %v1543 = vcvt.f32.s32 %v1537
        %v1544 = vshll.u32 %v1543, 16
        %v1545 = vadd.s32 %v1544, %v1542
        %v1546 = vsel %vm1123, %v1510, 2147483647
        %v1547 = vand.u32 %v1546, 65535
        %v1548 = vshra.s32 %v1546, 16
        %v1549 = vcvt.s32.f32 %v1547
        %v1550 = vcvt.s32.f32 %v1548
        %1551 = vmin.xlane.f32.xlu0 %v1550
        %v1552 = vpop.xlane.xlu0 %1551
        %vm1553 = vcmp.eq.f32.partialorder %v1550, %v1552
        %v1554 = vsel %vm1553, %v1549, inf
        %1555 = vmin.xlane.f32.xlu0 %v1554
        %v1556 = vpop.xlane.xlu0 %1555
        %v1557 = vcvt.f32.s32 %v1556
        %v1558 = vcvt.f32.s32 %v1552
        %v1559 = vshll.u32 %v1558, 16
        %v1560 = vadd.s32 %v1559, %v1557
        %v1561 = vsel %vm1123, %v1511, 2147483647
        %v1562 = vand.u32 %v1561, 65535
        %v1563 = vshra.s32 %v1561, 16
        %v1564 = vcvt.s32.f32 %v1562
        %v1565 = vcvt.s32.f32 %v1563
        %1566 = vmin.xlane.f32.xlu0 %v1565
        %v1567 = vpop.xlane.xlu0 %1566
        %vm1568 = vcmp.eq.f32.partialorder %v1565, %v1567
        %v1569 = vsel %vm1568, %v1564, inf
        %1570 = vmin.xlane.f32.xlu0 %v1569
        %v1571 = vpop.xlane.xlu0 %1570
        %v1572 = vcvt.f32.s32 %v1571
        %v1573 = vcvt.f32.s32 %v1567
        %v1574 = vshll.u32 %v1573, 16
        %v1575 = vadd.s32 %v1574, %v1572
        %v1576 = vsel %vm1123, %v1512, 2147483647
        %v1577 = vand.u32 %v1576, 65535
        %v1578 = vshra.s32 %v1576, 16
        %v1579 = vcvt.s32.f32 %v1577
        %v1580 = vcvt.s32.f32 %v1578
        %1581 = vmin.xlane.f32.xlu0 %v1580
        %v1582 = vpop.xlane.xlu0 %1581
        %vm1583 = vcmp.eq.f32.partialorder %v1580, %v1582
        %v1584 = vsel %vm1583, %v1579, inf
        %1585 = vmin.xlane.f32.xlu0 %v1584
        %v1586 = vpop.xlane.xlu0 %1585
        %v1587 = vcvt.f32.s32 %v1586
        %v1588 = vcvt.f32.s32 %v1582
        %v1589 = vshll.u32 %v1588, 16
        %v1590 = vadd.s32 %v1589, %v1587
        %v1591 = vsel %vm1123, %v1513, 2147483647
        %v1592 = vand.u32 %v1591, 65535
        %v1593 = vshra.s32 %v1591, 16
        %v1594 = vcvt.s32.f32 %v1592
        %v1595 = vcvt.s32.f32 %v1593
        %1596 = vmin.xlane.f32.xlu0 %v1595
        %v1597 = vpop.xlane.xlu0 %1596
        %vm1598 = vcmp.eq.f32.partialorder %v1595, %v1597
        %v1599 = vsel %vm1598, %v1594, inf
        %1600 = vmin.xlane.f32.xlu0 %v1599
        %v1601 = vpop.xlane.xlu0 %1600
        %v1602 = vcvt.f32.s32 %v1601
        %v1603 = vcvt.f32.s32 %v1597
        %v1604 = vshll.u32 %v1603, 16
        %v1605 = vadd.s32 %v1604, %v1602
        %v1606 = vsel %vm1123, %v1514, 2147483647
        %v1607 = vand.u32 %v1606, 65535
        %v1608 = vshra.s32 %v1606, 16
        %v1609 = vcvt.s32.f32 %v1607
        %v1610 = vcvt.s32.f32 %v1608
        %1611 = vmin.xlane.f32.xlu0 %v1610
        %v1612 = vpop.xlane.xlu0 %1611
        %vm1613 = vcmp.eq.f32.partialorder %v1610, %v1612
        %v1614 = vsel %vm1613, %v1609, inf
        %1615 = vmin.xlane.f32.xlu0 %v1614
        %v1616 = vpop.xlane.xlu0 %1615
        %v1617 = vcvt.f32.s32 %v1616
        %v1618 = vcvt.f32.s32 %v1612
        %v1619 = vshll.u32 %v1618, 16
        %v1620 = vadd.s32 %v1619, %v1617
        %v1621 = vsel %vm1123, %v1515, 2147483647
        %v1622 = vand.u32 %v1621, 65535
        %v1623 = vshra.s32 %v1621, 16
        %v1624 = vcvt.s32.f32 %v1622
        %v1625 = vcvt.s32.f32 %v1623
        %1626 = vmin.xlane.f32.xlu0 %v1625
        %v1627 = vpop.xlane.xlu0 %1626
        %vm1628 = vcmp.eq.f32.partialorder %v1625, %v1627
        %v1629 = vsel %vm1628, %v1624, inf
        %1630 = vmin.xlane.f32.xlu0 %v1629
        %v1631 = vpop.xlane.xlu0 %1630
        %v1632 = vcvt.f32.s32 %v1631
        %v1633 = vcvt.f32.s32 %v1627
        %v1634 = vshll.u32 %v1633, 16
        %v1635 = vadd.s32 %v1634, %v1632
        %vm1636 = vcmp.eq.s32.totalorder %v1088, %v1530
        %vm1637 = vcmp.eq.s32.totalorder %v1088, %v1545
        %vm1638 = vcmp.eq.s32.totalorder %v1088, %v1560
        %vm1639 = vcmp.eq.s32.totalorder %v1088, %v1575
        %vm1640 = vcmp.eq.s32.totalorder %v1088, %v1590
        %vm1641 = vcmp.eq.s32.totalorder %v1088, %v1605
        %vm1642 = vcmp.eq.s32.totalorder %v1088, %v1620
        %vm1643 = vcmp.eq.s32.totalorder %v1088, %v1635
        %v1644 = vsel %vm1636, inf, %v1468
        %v1645 = vsel %vm1637, inf, %v1469
        %v1646 = vsel %vm1638, inf, %v1470
        %v1647 = vsel %vm1639, inf, %v1471
        %v1648 = vsel %vm1640, inf, %v1472
        %v1649 = vsel %vm1641, inf, %v1473
        %v1650 = vsel %vm1642, inf, %v1474
        %v1651 = vsel %vm1643, inf, %v1475
        %v1652 = vsel %vm1123, %v1644, inf
        %1653 = vmin.xlane.f32.xlu0 %v1652
        %v1654 = vpop.xlane.xlu0 %1653
        %v1655 = vsel %vm1123, %v1645, inf
        %1656 = vmin.xlane.f32.xlu0 %v1655
        %v1657 = vpop.xlane.xlu0 %1656
        %v1658 = vsel %vm1123, %v1646, inf
        %1659 = vmin.xlane.f32.xlu0 %v1658
        %v1660 = vpop.xlane.xlu0 %1659
        %v1661 = vsel %vm1123, %v1647, inf
        %1662 = vmin.xlane.f32.xlu0 %v1661
        %v1663 = vpop.xlane.xlu0 %1662
        %v1664 = vsel %vm1123, %v1648, inf
        %1665 = vmin.xlane.f32.xlu0 %v1664
        %v1666 = vpop.xlane.xlu0 %1665
        %v1667 = vsel %vm1123, %v1649, inf
        %1668 = vmin.xlane.f32.xlu0 %v1667
        %v1669 = vpop.xlane.xlu0 %1668
        %v1670 = vsel %vm1123, %v1650, inf
        %1671 = vmin.xlane.f32.xlu0 %v1670
        %v1672 = vpop.xlane.xlu0 %1671
        %v1673 = vsel %vm1123, %v1651, inf
        %1674 = vmin.xlane.f32.xlu0 %v1673
        %v1675 = vpop.xlane.xlu0 %1674
        %v1676 = vmul.f32 %v1126, -1111.1111
        %v1677 = vmul.f32 %v1129, -1111.1111
        %v1678 = vmul.f32 %v1132, -1111.1111
        %v1679 = vmul.f32 %v1135, -1111.1111
        %v1680 = vmul.f32 %v1138, -1111.1111
        %v1681 = vmul.f32 %v1141, -1111.1111
        %v1682 = vmul.f32 %v1144, -1111.1111
        %v1683 = vmul.f32 %v1147, -1111.1111
        %v1684 = vmul.f32 %v1676, 1.442695
        %v1685 = vpow.pop %v1684
        %v1686 = vmul.f32 %v1677, 1.442695
        %v1687 = vpow.pop %v1686
        %v1688 = vmul.f32 %v1678, 1.442695
        %v1689 = vpow.pop %v1688
        %v1690 = vmul.f32 %v1679, 1.442695
        %v1691 = vpow.pop %v1690
        %v1692 = vmul.f32 %v1680, 1.442695
        %v1693 = vpow.pop %v1692
        %v1694 = vmul.f32 %v1681, 1.442695
        %v1695 = vpow.pop %v1694
        %v1696 = vmul.f32 %v1682, 1.442695
        %v1697 = vpow.pop %v1696
        %v1698 = vmul.f32 %v1683, 1.442695
        %v1699 = vpow.pop %v1698
        %v1700 = vmul.f32 %v1126, %v1685
        %v1701 = vmul.f32 %v1129, %v1687
        %v1702 = vmul.f32 %v1132, %v1689
        %v1703 = vmul.f32 %v1135, %v1691
        %v1704 = vmul.f32 %v1138, %v1693
        %v1705 = vmul.f32 %v1141, %v1695
        %v1706 = vmul.f32 %v1144, %v1697
        %v1707 = vmul.f32 %v1147, %v1699
        %v1708 = vsub.f32 0.0, %v1700
        %v1709 = vsub.f32 0.0, %v1701
        %v1710 = vsub.f32 0.0, %v1702
        %v1711 = vsub.f32 0.0, %v1703
        %v1712 = vsub.f32 0.0, %v1704
        %v1713 = vsub.f32 0.0, %v1705
        %v1714 = vsub.f32 0.0, %v1706
        %v1715 = vsub.f32 0.0, %v1707
        %v1716 = vmul.f32 %v1302, -1111.1111
        %v1717 = vmul.f32 %v1305, -1111.1111
        %v1718 = vmul.f32 %v1308, -1111.1111
        %v1719 = vmul.f32 %v1311, -1111.1111
        %v1720 = vmul.f32 %v1314, -1111.1111
        %v1721 = vmul.f32 %v1317, -1111.1111
        %v1722 = vmul.f32 %v1320, -1111.1111
        %v1723 = vmul.f32 %v1323, -1111.1111
        %v1724 = vmul.f32 %v1716, 1.442695
        %v1725 = vpow.pop %v1724
        %v1726 = vmul.f32 %v1717, 1.442695
        %v1727 = vpow.pop %v1726
        %v1728 = vmul.f32 %v1718, 1.442695
        %v1729 = vpow.pop %v1728
        %v1730 = vmul.f32 %v1719, 1.442695
        %v1731 = vpow.pop %v1730
        %v1732 = vmul.f32 %v1720, 1.442695
        %v1733 = vpow.pop %v1732
        %v1734 = vmul.f32 %v1721, 1.442695
        %v1735 = vpow.pop %v1734
        %v1736 = vmul.f32 %v1722, 1.442695
        %v1737 = vpow.pop %v1736
        %v1738 = vmul.f32 %v1723, 1.442695
        %v1739 = vpow.pop %v1738
        %v1740 = vmul.f32 %v1302, %v1725
        %v1741 = vmul.f32 %v1305, %v1727
        %v1742 = vmul.f32 %v1308, %v1729
        %v1743 = vmul.f32 %v1311, %v1731
        %v1744 = vmul.f32 %v1314, %v1733
        %v1745 = vmul.f32 %v1317, %v1735
        %v1746 = vmul.f32 %v1320, %v1737
        %v1747 = vmul.f32 %v1323, %v1739
        %v1748 = vsub.f32 %v1708, %v1740
        %v1749 = vsub.f32 %v1709, %v1741
        %v1750 = vsub.f32 %v1710, %v1742
        %v1751 = vsub.f32 %v1711, %v1743
        %v1752 = vsub.f32 %v1712, %v1744
        %v1753 = vsub.f32 %v1713, %v1745
        %v1754 = vsub.f32 %v1714, %v1746
        %v1755 = vsub.f32 %v1715, %v1747
        %v1756 = vmul.f32 %v1478, -1111.1111
        %v1757 = vmul.f32 %v1481, -1111.1111
        %v1758 = vmul.f32 %v1484, -1111.1111
        %v1759 = vmul.f32 %v1487, -1111.1111
        %v1760 = vmul.f32 %v1490, -1111.1111
        %v1761 = vmul.f32 %v1493, -1111.1111
        %v1762 = vmul.f32 %v1496, -1111.1111
        %v1763 = vmul.f32 %v1499, -1111.1111
        %v1764 = vmul.f32 %v1756, 1.442695
        %v1765 = vpow.pop %v1764
        %v1766 = vmul.f32 %v1757, 1.442695
        %v1767 = vpow.pop %v1766
        %v1768 = vmul.f32 %v1758, 1.442695
        %v1769 = vpow.pop %v1768
        %v1770 = vmul.f32 %v1759, 1.442695
        %v1771 = vpow.pop %v1770
        %v1772 = vmul.f32 %v1760, 1.442695
        %v1773 = vpow.pop %v1772
        %v1774 = vmul.f32 %v1761, 1.442695
        %v1775 = vpow.pop %v1774
        %v1776 = vmul.f32 %v1762, 1.442695
        %v1777 = vpow.pop %v1776
        %v1778 = vmul.f32 %v1763, 1.442695
        %v1779 = vpow.pop %v1778
        %v1780 = vmul.f32 %v1478, %v1765
        %v1781 = vmul.f32 %v1481, %v1767
        %v1782 = vmul.f32 %v1484, %v1769
        %v1783 = vmul.f32 %v1487, %v1771
        %v1784 = vmul.f32 %v1490, %v1773
        %v1785 = vmul.f32 %v1493, %v1775
        %v1786 = vmul.f32 %v1496, %v1777
        %v1787 = vmul.f32 %v1499, %v1779
        %v1788 = vsub.f32 %v1748, %v1780
        %v1789 = vsub.f32 %v1749, %v1781
        %v1790 = vsub.f32 %v1750, %v1782
        %v1791 = vsub.f32 %v1751, %v1783
        %v1792 = vsub.f32 %v1752, %v1784
        %v1793 = vsub.f32 %v1753, %v1785
        %v1794 = vsub.f32 %v1754, %v1786
        %v1795 = vsub.f32 %v1755, %v1787
        %v1796 = vmul.f32 %v1654, -1111.1111
        %v1797 = vmul.f32 %v1657, -1111.1111
        %v1798 = vmul.f32 %v1660, -1111.1111
        %v1799 = vmul.f32 %v1663, -1111.1111
        %v1800 = vmul.f32 %v1666, -1111.1111
        %v1801 = vmul.f32 %v1669, -1111.1111
        %v1802 = vmul.f32 %v1672, -1111.1111
        %v1803 = vmul.f32 %v1675, -1111.1111
        %v1804 = vmul.f32 %v1796, 1.442695
        %v1805 = vpow.pop %v1804
        %v1806 = vmul.f32 %v1797, 1.442695
        %v1807 = vpow.pop %v1806
        %v1808 = vmul.f32 %v1798, 1.442695
        %v1809 = vpow.pop %v1808
        %v1810 = vmul.f32 %v1799, 1.442695
        %v1811 = vpow.pop %v1810
        %v1812 = vmul.f32 %v1800, 1.442695
        %v1813 = vpow.pop %v1812
        %v1814 = vmul.f32 %v1801, 1.442695
        %v1815 = vpow.pop %v1814
        %v1816 = vmul.f32 %v1802, 1.442695
        %v1817 = vpow.pop %v1816
        %v1818 = vmul.f32 %v1803, 1.442695
        %v1819 = vpow.pop %v1818
        %v1820 = vmul.f32 %v1654, %v1805
        %v1821 = vmul.f32 %v1657, %v1807
        %v1822 = vmul.f32 %v1660, %v1809
        %v1823 = vmul.f32 %v1663, %v1811
        %v1824 = vmul.f32 %v1666, %v1813
        %v1825 = vmul.f32 %v1669, %v1815
        %v1826 = vmul.f32 %v1672, %v1817
        %v1827 = vmul.f32 %v1675, %v1819
        %v1828 = vsub.f32 %v1788, %v1820
        %v1829 = vsub.f32 %v1789, %v1821
        %v1830 = vsub.f32 %v1790, %v1822
        %v1831 = vsub.f32 %v1791, %v1823
        %v1832 = vsub.f32 %v1792, %v1824
        %v1833 = vsub.f32 %v1793, %v1825
        %v1834 = vsub.f32 %v1794, %v1826
        %v1835 = vsub.f32 %v1795, %v1827
        %vm1836 = vcmask 7168
        %v1837 = vsel %vm1836, %v1828, 0.0
        %v1838 = vsel %vm1836, %v1829, 0.0
        %v1839 = vadd.f32 %v1837, %v1838
        %v1840 = vsel %vm1836, %v1830, 0.0
        %v1841 = vadd.f32 %v1839, %v1840
        %v1842 = vsel %vm1836, %v1831, 0.0
        %v1843 = vadd.f32 %v1841, %v1842
        %v1844 = vsel %vm1836, %v1832, 0.0
        %v1845 = vadd.f32 %v1843, %v1844
        %v1846 = vsel %vm1836, %v1833, 0.0
        %v1847 = vadd.f32 %v1845, %v1846
        %v1848 = vsel %vm1836, %v1834, 0.0
        %v1849 = vadd.f32 %v1847, %v1848
        %v1850 = vsel %vm1836, %v1835, 0.0
        %v1851 = vadd.f32 %v1849, %v1850
        %1852 = vadd.xlane.f32.xlu0 %v1851
        %v1853 = vpop.xlane.xlu0 %1852
        %v1854 = vrot.slane %v1853, 4
        %v1855 = vadd.f32 %v1853, %v1854
        %v1856 = vrot.slane %v1855, 2
        %v1857 = vadd.f32 %v1855, %v1856
        %v1858 = vrot.slane %v1857, 1
        %v1859 = vadd.f32 %v1857, %v1858
        %s1860 = vtos %v1859
        %v1861 = vstv %s1860
        %1862 = vst [vmem:[%s212] sm:$0xff] %v1861
        %s1863 = sand.u32 %s119, 1
        %s1864 = scalar_lea.sflag [#allocation3], %s1863
        %s1865 = sand.u32 %s119, 1
        %s1866 = smul.addr %s1865, 8
        %s1867 = scalar_lea.vmem [#allocation2], %s1866
        // Predicated region
        $region33: #{tpu_custom_call.1} parent=31 // pred_check
          %p1868 = pneg %p129
        $region34: #{tpu_custom_call.1} parent=31 // pred_check_branch
          %1870 = sbr.rel (%p1868) target = $region36
        $region35: #{tpu_custom_call.1} parent=31 // pred_region
          %s1872 = ssub.s32 128, 128
          %1873 = vsyncadd %s1864, %s1872
          %s1874 = sadd.s32 %s22, %s21
          %s1875 = smul.addr %s1874, 128
          %s1876 = scalar_lea.hbm %s3, %s1875
          %s1878 = sshll.u32 %s1867, 4
          %s1879 = int_to_ptr.vmem [resolvable:$true] %s1878
          %1881 = dma.vmem_to_hbm [thread:$0]  %s1879, 128, %s1876, %s1864
        $region36: #{tpu_custom_call.1} parent=31 // pred_fallthru
          _
      $region32: #{tpu_custom_call.1} parent=5 // pred_fallthru
        _
      %p1882 = scmp.le.s32.totalorder 2, %s12
      // Predicated region
      $region37: #{tpu_custom_call.1} parent=5 // pred_check
        %p1883 = pneg %p1882
      $region38: #{tpu_custom_call.1} parent=5 // pred_check_branch
        %1885 = sbr.rel (%p1883) target = $region40
      $region39: #{tpu_custom_call.1} parent=5 // pred_region
        %s1886 = ssub.s32 %s12, 2
        // Predicated region
        $region41: #{tpu_custom_call.1} parent=39 // pred_check
          %p1887 = pneg %p135
        $region42: #{tpu_custom_call.1} parent=39 // pred_check_branch
          %1889 = sbr.rel (%p1887) target = $region44
        $region43: #{tpu_custom_call.1} parent=39 // pred_region
          %s1890 = sand.u32 %s120, 1
          %s1891 = scalar_lea.sflag [#allocation3], %s1890
          %s1892 = sand.u32 %s120, 1
          %s1893 = smul.addr %s1892, 8
          %s1894 = scalar_lea.vmem [#allocation2], %s1893
          %1895 = dma.done %s1891, 128
        $region44: #{tpu_custom_call.1} parent=39 // pred_fallthru
          _
      $region40: #{tpu_custom_call.1} parent=5 // pred_fallthru
        _
    $region6: #{tpu_custom_call.1} parent=1 // loop_footer
      %s16 = sadd.s32 1, %s12
    $region7: #{tpu_custom_call.1} parent=1 // loop_footer_branch
      %11 = sbr.rel target = $region3
    $region8: #{tpu_custom_call.1} parent=1 // loop_exit
      _
    %1896 = vsyncpa [#allocation3], 1
    %s1897 = scalar_lea.sflag [#allocation3], 1
    %1898 = vsyncpa %s1897, 1

</llo_original>
